<compile_context>
chip_gen: v5e
topology: v5e:2x2
jax: 0.10.0
libtpu: 0.0.40
codegen_flags: <defaults>
</compile_context>

<pallas_src>
from functools import partial

import jax
import jax.numpy as jnp
from jax.experimental import pallas as pl
from jax.experimental.pallas import tpu as pltpu


# ----------------------------------------------------------------------------
# Fused MBConv kernel: one grid step == NB images
# ----------------------------------------------------------------------------
def mbconv_fused_kernel(x_ref,                      # (NB*Cin, H*W)
                        we_ref, be_ref,             # expand: block-diag W (scale folded), bias
                        wd_ref, bd_ref,             # depthwise: (K*K, NB*Cexp) (scale folded), bias
                        wr_ref, br_ref,             # SE reduce (block-diag), bias
                        wx_ref, bx_ref,             # SE expand (block-diag), bias
                        wpt_ref, bp_ref,            # projection W^T (block-diag, scale folded), bias
                        o_ref,                      # (NB*Cout, Ho*Wo)
                        hbuf_ref, dbuf_ref,         # VMEM scratches
                        *, K, stride, H, W, Ho, Wo, pad, NBC, RH, RB, has_shortcut):
    Hp = H + 2 * pad
    Wp = W + 2 * pad

    # -- zero only the 4 padding border strips; interior is fully overwritten below.
    #    Done every grid step (not gated on program_id): with the "parallel" grid
    #    each TensorCore owns its own scratch on multi-core parts.
    hbuf_ref[0:pad, :, :] = jnp.zeros((pad, Wp, NBC), jnp.float32)
    hbuf_ref[pad + H:Hp, :, :] = jnp.zeros((pad, Wp, NBC), jnp.float32)
    hbuf_ref[pad:pad + H, 0:pad, :] = jnp.zeros((H, pad, NBC), jnp.float32)
    hbuf_ref[pad:pad + H, pad + W:Wp, :] = jnp.zeros((H, pad, NBC), jnp.float32)

    # -- stage 1: 1x1 expand conv (BN scale folded into W) + bias + SiLU, row-tiled.
    be = be_ref[...]                                                  # (1, NBC)

    def expand_body(i, carry):
        r0 = i * RH
        c0 = r0 * W
        if (RH * W) % 128 == 0:
            c0 = pl.multiple_of(c0, 128)
        xs = x_ref[:, pl.ds(c0, RH * W)].astype(jnp.float32)          # (NB*Cin, RH*W)
        h = jax.lax.dot_general(xs, we_ref[...], (((0,), (0,)), ((), ())),
                                preferred_element_type=jnp.float32)   # (RH*W, NBC)
        h = h + be
        h = h * jax.nn.sigmoid(h)                                     # SiLU
        hbuf_ref[pl.ds(pad + r0, RH), pad:pad + W, :] = h.reshape(RH, W, NBC)
        return carry

    jax.lax.fori_loop(0, H // RH, expand_body, 0)

    # -- stage 2: depthwise KxK conv (BN scale folded) + bias + SiLU, row-tiled;
    #    the SE channel sum is accumulated on the fly.  Stride is folded into the
    #    hbuf reads (strided VMEM loads, no wasted compute).
    bd = bd_ref[...].reshape(1, 1, NBC)

    def dw_body(rb, se_sum):
        r0 = rb * RB
        acc = jnp.zeros((RB, Wo, NBC), jnp.float32)
        for kh in range(K):
            for kw in range(K):
                if stride == 1:
                    patch = hbuf_ref[pl.ds(r0 + kh, RB), kw:kw + Wo, :]
                else:
                    patch = hbuf_ref[pl.ds(r0 * stride + kh, RB, stride),
                                     pl.ds(kw, Wo, stride), :]
                tap = kh * K + kw
                w_tap = wd_ref[tap:tap + 1, :].reshape(1, 1, NBC)
                acc = acc + patch * w_tap
        d = acc + bd
        d = d * jax.nn.sigmoid(d)                                     # SiLU
        dbuf_ref[pl.ds(r0, RB), :, :] = d
        return se_sum + jnp.sum(d.reshape(RB * Wo, NBC), axis=0, keepdims=True)

    se_sum = jax.lax.fori_loop(0, Ho // RB, dw_body,
                               jnp.zeros((1, NBC), jnp.float32))

    # -- stage 3: squeeze-excite gate.  M=1 matmuls on the MXU: accepted knowingly
    #    (tiny and off the dominant depthwise path).
    s = se_sum * (1.0 / (Ho * Wo))                                    # (1, NBC)
    r = jnp.dot(s, wr_ref[...], preferred_element_type=jnp.float32) + br_ref[...]
    r = r * jax.nn.sigmoid(r)                                         # SiLU
    g = jax.nn.sigmoid(
        jnp.dot(r, wx_ref[...], preferred_element_type=jnp.float32) + bx_ref[...])
    g3 = g.reshape(1, 1, NBC)

    # -- stage 4: gate + 1x1 projection (BN scale folded) + bias (+ residual),
    #    row-tiled; output written NCHW, lane-dense (RB*Wo-wide 128-multiple slabs).
    def proj_body(rb, carry):
        r0 = rb * RB
        c0 = r0 * Wo
        if (RB * Wo) % 128 == 0:
            c0 = pl.multiple_of(c0, 128)
        d = dbuf_ref[pl.ds(r0, RB), :, :]
        gated = (d * g3).reshape(RB * Wo, NBC)
        y = jax.lax.dot_general(wpt_ref[...], gated, (((1,), (1,)), ((), ())),
                                preferred_element_type=jnp.float32)   # (NB*Cout, RB*Wo)
        y = y + bp_ref[...]
        if has_shortcut:  # DropPath is identity in eval mode
            y = y + x_ref[:, pl.ds(c0, RB * Wo)].astype(jnp.float32)
        o_ref[:, pl.ds(c0, RB * Wo)] = y.astype(o_ref.dtype)
        return carry

    jax.lax.fori_loop(0, Ho // RB, proj_body, 0)


# ----------------------------------------------------------------------------
# Host-side helpers
# ----------------------------------------------------------------------------
def _block_diag(w, nb):
    if nb == 1:
        return w
    r, c = w.shape
    out = jnp.zeros((nb * r, nb * c), w.dtype)
    for i in range(nb):
        out = out.at[i * r:(i + 1) * r, i * c:(i + 1) * c].set(w)
    return out


def _pick_batch_block(n, cexp, cin, cout):
    """Images fused per grid step, chosen to maximise lane utilisation of NB*Cexp.

    Smaller NB wins on ties so the grid keeps >1 step for multi-core (v7x) parts.
    NB*Cin / NB*Cout must stay 8-divisible (unless NB==N) for legal block tiling.
    """
    def util(nb):
        lanes = nb * cexp
        return lanes / float(pl.cdiv(lanes, 128) * 128)

    cands = []
    for nb in range(1, n + 1):
        if n % nb:
            continue
        if nb != n and ((nb * cin) % 8 or (nb * cout) % 8):
            continue
        cands.append(nb)
    if not cands:
        cands = [n]
    best = cands[0]
    for nb in cands[1:]:
        if util(nb) > util(best) + 1e-9:
            best = nb
    return best


def _pick_row_block(rows, width):
    """Row-block size: prefer ~8 rows whose flattened width is a 128-lane multiple."""
    for rb in (8, 16, 4, 32, 2):
        if rb <= rows and rows % rb == 0 and (rb * width) % 128 == 0:
            return rb
    for rb in (8, 4, 2, 1):
        if rb <= rows and rows % rb == 0:
            return rb
    return rows


def _padded_bytes(shape, itemsize=4):
    shape = tuple(int(d) for d in shape)
    if len(shape) == 1:
        shape = (1,) + shape
    lead = 1
    for d in shape[:-2]:
        lead *= d
    sub = pl.cdiv(shape[-2], 8) * 8
    lane = pl.cdiv(shape[-1], 128) * 128
    return lead * sub * lane * itemsize


def _vmem_capacity_bytes():
    try:
        info = pltpu.get_tpu_info()
        cap = int(getattr(info, "vmem_capacity_bytes", 0))
        if cap > 0:
            return cap
    except Exception:
        pass
    return 64 << 20  # conservative (v7x per-core VMEM)


# ----------------------------------------------------------------------------
# Wrapper: a single pallas_call; all folding / tiling done once on the host
# ----------------------------------------------------------------------------
def mbconv_forward(x_nchw, p, *, kernel_size, stride, has_shortcut):
    N, Cin, H, W = x_nchw.shape
    K = kernel_size
    pad = (K - 1) // 2
    Hp, Wp = H + 2 * pad, W + 2 * pad
    Ho = (Hp - K) // stride + 1
    Wo = (Wp - K) // stride + 1
    Cexp = p["w_expand"].shape[1]
    Cout = p["w_proj"].shape[1]

    NB = _pick_batch_block(N, Cexp, Cin, Cout)
    NBC = NB * Cexp
    RH = _pick_row_block(H, W)    # expand-pass row block (input rows)
    RB = _pick_row_block(Ho, Wo)  # depthwise / projection row block (output rows)

    # ---- BN scales folded into weights; NB-way channel concat on the lane axis ----
    we = (p["w_expand"] * p["s_expand"]).astype(jnp.float32)
    we_bd = _block_diag(we, NB)                                    # (NB*Cin, NB*Cexp)
    be = jnp.tile(p["b_expand"], (1, NB))                          # (1, NB*Cexp)
    wd = (p["w_dw"] * p["s_dw"].reshape(1, 1, Cexp)).reshape(K * K, Cexp)
    wd = jnp.tile(wd, (1, NB))                                     # (K*K, NB*Cexp)
    bd = jnp.tile(p["b_dw"], (1, NB))                              # (1, NB*Cexp)
    wr_bd = _block_diag(p["w_se_r"].astype(jnp.float32), NB)       # (NB*Cexp, NB*Cs)
    br = jnp.tile(p["b_se_r"], (1, NB))                            # (1, NB*Cs)
    wx_bd = _block_diag(p["w_se_e"].astype(jnp.float32), NB)       # (NB*Cs, NB*Cexp)
    bx = jnp.tile(p["b_se_e"], (1, NB))                            # (1, NB*Cexp)
    wpt = jnp.transpose(p["w_proj"] * p["s_proj"]).astype(jnp.float32)  # (Cout, Cexp)
    wpt_bd = _block_diag(wpt, NB)                                  # (NB*Cout, NB*Cexp)
    bp = jnp.tile(p["b_proj"].reshape(Cout, 1), (NB, 1))           # (NB*Cout, 1)

    x2 = x_nchw.reshape(N * Cin, H * W)                            # NCHW, lane-dense H*W

    # ---- generation-aware VMEM budget (double-buffered blocks + weights + scratches) --
    weight_arrs = (we_bd, be, wd, bd, wr_bd, br, wx_bd, bx, wpt_bd, bp)
    est = 2 * _padded_bytes((NB * Cin, H * W))        # pipelined input block
    est += 2 * _padded_bytes((NB * Cout, Ho * Wo))    # pipelined output block
    est += sum(2 * _padded_bytes(w.shape) for w in weight_arrs)
    est += _padded_bytes((Hp, Wp, NBC))               # hbuf scratch
    est += _padded_bytes((Ho, Wo, NBC))               # dbuf scratch
    est += 6 * _padded_bytes((max(RB * Wo, RH * W), NBC))  # live-value / spill headroom

    cap = _vmem_capacity_bytes()
    vmem_limit = min(int(cap * 3 // 4), max(est + (8 << 20), 32 << 20))
    # TODO(synk): add a multi-pallas_call, HBM-streamed variant for stages whose
    # per-step expanded map exceeds the VMEM budget (not needed for these shapes).
    assert est <= vmem_limit, (
        f"fused MBConv VMEM estimate {est} B exceeds budget {vmem_limit} B")

    def full_spec(arr):
        shp = arr.shape
        return pl.BlockSpec(shp, lambda n: (0,) * len(shp))

    out2 = pl.pallas_call(
        partial(mbconv_fused_kernel, K=K, stride=stride, H=H, W=W, Ho=Ho, Wo=Wo,
                pad=pad, NBC=NBC, RH=RH, RB=RB, has_shortcut=has_shortcut),
        out_shape=jax.ShapeDtypeStruct((N * Cout, Ho * Wo), x_nchw.dtype),
        grid=(N // NB,),
        in_specs=[
            pl.BlockSpec((NB * Cin, H * W), lambda n: (n, 0)),
            full_spec(we_bd), full_spec(be),
            full_spec(wd), full_spec(bd),
            full_spec(wr_bd), full_spec(br),
            full_spec(wx_bd), full_spec(bx),
            full_spec(wpt_bd), full_spec(bp),
        ],
        out_specs=pl.BlockSpec((NB * Cout, Ho * Wo), lambda n: (n, 0)),
        scratch_shapes=[
            pltpu.VMEM((Hp, Wp, NBC), jnp.float32),   # padded expanded map
            pltpu.VMEM((Ho, Wo, NBC), jnp.float32),   # depthwise output (pre-gate)
        ],
        compiler_params=pltpu.CompilerParams(
            dimension_semantics=("parallel",),
            vmem_limit_bytes=int(vmem_limit)),
    )(x2, we_bd, be, wd, bd, wr_bd, br, wx_bd, bx, wpt_bd, bp)

    return out2.reshape(N, Cout, Ho, Wo)


# ----------------------------------------------------------------------------
# Pure-JAX reference (same folded-BN, eval-mode math) for the correctness check
# ----------------------------------------------------------------------------
def mbconv_reference(x_nchw, p, *, kernel_size, stride, has_shortcut):
    x = jnp.transpose(x_nchw, (0, 2, 3, 1))
    N, H, W, Cin = x.shape
    Cexp = p["w_expand"].shape[1]
    h = x.reshape(-1, Cin) @ p["w_expand"] * p["s_expand"] + p["b_expand"]
    h = h * jax.nn.sigmoid(h)
    h = h.reshape(N, H, W, Cexp)
    pad = (kernel_size - 1) // 2
    hp = jnp.pad(h, ((0, 0), (pad, pad), (pad, pad), (0, 0)))
    acc = jnp.zeros((N, H, W, Cexp), jnp.float32)
    for kh in range(kernel_size):
        for kw in range(kernel_size):
            acc = acc + hp[:, kh:kh + H, kw:kw + W, :] * p["w_dw"][kh, kw]
    d = acc * p["s_dw"] + p["b_dw"]
    d = d * jax.nn.sigmoid(d)
    if stride > 1:
        d = d[:, ::stride, ::stride, :]
    s = jnp.mean(d, axis=(1, 2))                              # (N, Cexp)
    r = s @ p["w_se_r"] + p["b_se_r"]
    r = r * jax.nn.sigmoid(r)
    e = jax.nn.sigmoid(r @ p["w_se_e"] + p["b_se_e"])
    se = d * e[:, None, None, :]
    No, Ho, Wo, _ = se.shape
    out = se.reshape(-1, Cexp) @ p["w_proj"] * p["s_proj"] + p["b_proj"]
    out = out.reshape(No, Ho, Wo, -1)
    if has_shortcut:
        out = out + x
    return jnp.transpose(out, (0, 3, 1, 2))


# ----------------------------------------------------------------------------
# Deterministic parameter init (eval-mode BN folded into scale/bias)
# ----------------------------------------------------------------------------
def init_params(key, input_c, out_c, expand_ratio, se_ratio, kernel_size, eps=1e-5):
    Cexp = input_c * expand_ratio
    Cs = int(input_c * se_ratio)
    ks = jax.random.split(key, 24)

    def bn_fold(k0, k1, k2, k3, C):
        gamma = 1.0 + 0.1 * jax.random.normal(k0, (C,))
        beta = 0.1 * jax.random.normal(k1, (C,))
        mean = 0.1 * jax.random.normal(k2, (C,))
        var = 1.0 + 0.1 * jnp.abs(jax.random.normal(k3, (C,)))
        s = gamma / jnp.sqrt(var + eps)
        b = beta - mean * s
        return (s.reshape(1, C).astype(jnp.float32), b.reshape(1, C).astype(jnp.float32))

    s_e, b_e = bn_fold(ks[0], ks[1], ks[2], ks[3], Cexp)
    s_d, b_d = bn_fold(ks[4], ks[5], ks[6], ks[7], Cexp)
    s_p, b_p = bn_fold(ks[8], ks[9], ks[10], ks[11], out_c)

    return {
        "w_expand": 0.2 * jax.random.normal(ks[12], (input_c, Cexp), jnp.float32),
        "s_expand": s_e, "b_expand": b_e,
        "w_dw": 0.2 * jax.random.normal(ks[13], (kernel_size, kernel_size, Cexp), jnp.float32),
        "s_dw": s_d, "b_dw": b_d,
        "w_se_r": 0.2 * jax.random.normal(ks[14], (Cexp, Cs), jnp.float32),
        "b_se_r": 0.1 * jax.random.normal(ks[15], (1, Cs), jnp.float32),
        "w_se_e": 0.2 * jax.random.normal(ks[16], (Cs, Cexp), jnp.float32),
        "b_se_e": 0.1 * jax.random.normal(ks[17], (1, Cexp), jnp.float32),
        "w_proj": 0.2 * jax.random.normal(ks[18], (Cexp, out_c), jnp.float32),
        "s_proj": s_p, "b_proj": b_p,
    }


if __name__ == "__main__":
    # (kernel_size, input_c, out_c, expand_ratio, stride, se_ratio)
    configs = [
        (3, 8, 8, 4, 1, 0.25),     # has_shortcut=True (DropPath identity in eval)
        (5, 16, 24, 6, 1, 0.25),   # no shortcut, larger kernel / channels
    ]
    key = jax.random.PRNGKey(0)
    for (K, cin, cout, er, stride, se_ratio) in configs:
        key, kx, kp = jax.random.split(key, 3)
        has_shortcut = (stride == 1 and cin == cout)
        x = jax.random.normal(kx, (2, cin, 16, 16), jnp.float32)   # NCHW like PyTorch
        params = init_params(kp, cin, cout, er, se_ratio, K)

        fwd = jax.jit(partial(mbconv_forward, kernel_size=K, stride=stride,
                              has_shortcut=has_shortcut))
        out = fwd(x, params)
        jax.block_until_ready(out)

        ref = mbconv_reference(x, params, kernel_size=K, stride=stride,
                               has_shortcut=has_shortcut)
        assert out.shape == ref.shape == (2, cout, 16, 16)
        err = float(jnp.max(jnp.abs(out - ref)))
        assert jnp.allclose(out, ref, rtol=1e-3, atol=1e-3), err

    print("KERNEL_OK")
</pallas_src>

<mosaic_0001>
module attributes {stable_mosaic.version = 11 : i64} {
  func.func @mbconv_fused_kernel(%arg0: i32, %arg1: memref<16x256xf32, #tpu.memory_space<vmem>>, %arg2: memref<16x64xf32, #tpu.memory_space<vmem>>, %arg3: memref<1x64xf32, #tpu.memory_space<vmem>>, %arg4: memref<9x64xf32, #tpu.memory_space<vmem>>, %arg5: memref<1x64xf32, #tpu.memory_space<vmem>>, %arg6: memref<64x4xf32, #tpu.memory_space<vmem>>, %arg7: memref<1x4xf32, #tpu.memory_space<vmem>>, %arg8: memref<4x64xf32, #tpu.memory_space<vmem>>, %arg9: memref<1x64xf32, #tpu.memory_space<vmem>>, %arg10: memref<16x64xf32, #tpu.memory_space<vmem>>, %arg11: memref<16x1xf32, #tpu.memory_space<vmem>>, %arg12: memref<16x256xf32, #tpu.memory_space<vmem>>, %arg13: memref<18x18x64xf32, #tpu.memory_space<vmem>>, %arg14: memref<16x16x64xf32, #tpu.memory_space<vmem>>) attributes {dimension_semantics = [#tpu.dimension_semantics<parallel>], iteration_bounds = array<i64: 1>, scalar_prefetch = 0 : i64, scratch_operands = 2 : i64, tpu.core_type = #tpu.core_type<tc>, window_params = [{transform_indices = @transform_0, window_bounds = array<i64: 16, 256>}, {pipeline_mode = #tpu.pipeline_mode<synchronous>, transform_indices = @transform_1, window_bounds = array<i64: 16, 64>}, {pipeline_mode = #tpu.pipeline_mode<synchronous>, transform_indices = @transform_2, window_bounds = array<i64: 1, 64>}, {pipeline_mode = #tpu.pipeline_mode<synchronous>, transform_indices = @transform_3, window_bounds = array<i64: 9, 64>}, {pipeline_mode = #tpu.pipeline_mode<synchronous>, transform_indices = @transform_4, window_bounds = array<i64: 1, 64>}, {pipeline_mode = #tpu.pipeline_mode<synchronous>, transform_indices = @transform_5, window_bounds = array<i64: 64, 4>}, {pipeline_mode = #tpu.pipeline_mode<synchronous>, transform_indices = @transform_6, window_bounds = array<i64: 1, 4>}, {pipeline_mode = #tpu.pipeline_mode<synchronous>, transform_indices = @transform_7, window_bounds = array<i64: 4, 64>}, {pipeline_mode = #tpu.pipeline_mode<synchronous>, transform_indices = @transform_8, window_bounds = array<i64: 1, 64>}, {pipeline_mode = #tpu.pipeline_mode<synchronous>, transform_indices = @transform_9, window_bounds = array<i64: 16, 64>}, {pipeline_mode = #tpu.pipeline_mode<synchronous>, transform_indices = @transform_10, window_bounds = array<i64: 16, 1>}, {transform_indices = @transform_11, window_bounds = array<i64: 16, 256>}]} {
    %cst = arith.constant 0.000000e+00 : f32
    %0 = vector.broadcast %cst : f32 to vector<1x18x64xf32>
    %c0 = arith.constant 0 : index
    %c0_0 = arith.constant 0 : index
    %c0_1 = arith.constant 0 : index
    %1 = vector.load %arg13[%c0, %c0_0, %c0_1] : memref<18x18x64xf32, #tpu.memory_space<vmem>>, vector<1x18x64xf32>
    tpu.vector_store %arg13[%c0, %c0_0, %c0_1], %0 {strides = array<i32>} : memref<18x18x64xf32, #tpu.memory_space<vmem>>, vector<1x18x64xf32>,
    %cst_2 = arith.constant 0.000000e+00 : f32
    %2 = vector.broadcast %cst_2 : f32 to vector<1x18x64xf32>
    %c17 = arith.constant 17 : index
    %c0_3 = arith.constant 0 : index
    %c0_4 = arith.constant 0 : index
    %3 = vector.load %arg13[%c17, %c0_3, %c0_4] : memref<18x18x64xf32, #tpu.memory_space<vmem>>, vector<1x18x64xf32>
    tpu.vector_store %arg13[%c17, %c0_3, %c0_4], %2 {strides = array<i32>} : memref<18x18x64xf32, #tpu.memory_space<vmem>>, vector<1x18x64xf32>,
    %cst_5 = arith.constant 0.000000e+00 : f32
    %4 = vector.broadcast %cst_5 : f32 to vector<16x1x64xf32>
    %c1 = arith.constant 1 : index
    %c0_6 = arith.constant 0 : index
    %c0_7 = arith.constant 0 : index
    %5 = vector.load %arg13[%c1, %c0_6, %c0_7] : memref<18x18x64xf32, #tpu.memory_space<vmem>>, vector<16x1x64xf32>
    tpu.vector_store %arg13[%c1, %c0_6, %c0_7], %4 {strides = array<i32>} : memref<18x18x64xf32, #tpu.memory_space<vmem>>, vector<16x1x64xf32>,
    %cst_8 = arith.constant 0.000000e+00 : f32
    %6 = vector.broadcast %cst_8 : f32 to vector<16x1x64xf32>
    %c1_9 = arith.constant 1 : index
    %c17_10 = arith.constant 17 : index
    %c0_11 = arith.constant 0 : index
    %7 = vector.load %arg13[%c1_9, %c17_10, %c0_11] : memref<18x18x64xf32, #tpu.memory_space<vmem>>, vector<16x1x64xf32>
    tpu.vector_store %arg13[%c1_9, %c17_10, %c0_11], %6 {strides = array<i32>} : memref<18x18x64xf32, #tpu.memory_space<vmem>>, vector<16x1x64xf32>,
    %c0_12 = arith.constant 0 : index
    %c0_13 = arith.constant 0 : index
    %8 = vector.load %arg3[%c0_12, %c0_13] : memref<1x64xf32, #tpu.memory_space<vmem>>, vector<1x64xf32>
    %c0_i32 = arith.constant 0 : i32
    %c2_i32 = arith.constant 2 : i32
    %9 = arith.addi %c0_i32, %c2_i32 : i32
    %c1_i32 = arith.constant 1 : i32
    scf.for %arg15 = %c0_i32 to %9 step %c1_i32  : i32 {
      %c8_i32 = arith.constant 8 : i32
      %38 = arith.muli %arg15, %c8_i32 : i32
      %c16_i32 = arith.constant 16 : i32
      %39 = arith.muli %38, %c16_i32 : i32
      %40 = tpu.assume_multiple %39, 128 : i32
      %c0_39 = arith.constant 0 : index
      %41 = arith.index_cast %40 : i32 to index
      %42 = vector.load %arg1[%c0_39, %41] : memref<16x256xf32, #tpu.memory_space<vmem>>, vector<16x128xf32>
      %c0_40 = arith.constant 0 : index
      %c0_41 = arith.constant 0 : index
      %43 = vector.load %arg2[%c0_40, %c0_41] : memref<16x64xf32, #tpu.memory_space<vmem>>, vector<16x64xf32>
      %cst_42 = arith.constant dense<0.000000e+00> : vector<128x64xf32>
      %44 = tpu.matmul %42, %43, %cst_42 {dimension_numbers = #tpu.dot_dimension_numbers<[0], [0], [1], [1], [0, 1, 1, 1], [], []>} : vector<16x128xf32>, vector<16x64xf32>, vector<128x64xf32> -> vector<128x64xf32>
      %45 = vector.broadcast %8 : vector<1x64xf32> to vector<128x64xf32>
      %46 = arith.addf %44, %45 : vector<128x64xf32>
      %47 = arith.negf %46 : vector<128x64xf32>
      %48 = math.exp %47 : vector<128x64xf32>
      %cst_43 = arith.constant 1.000000e+00 : f32
      %49 = vector.broadcast %cst_43 : f32 to vector<128x64xf32>
      %50 = arith.addf %49, %48 : vector<128x64xf32>
      %51 = arith.divf %49, %50 : vector<128x64xf32>
      %52 = arith.mulf %46, %51 : vector<128x64xf32>
      %53 = vector.shape_cast %52 : vector<128x64xf32> to vector<8x16x64xf32>
      %c1_i32_44 = arith.constant 1 : i32
      %54 = arith.addi %c1_i32_44, %38 : i32
      %55 = arith.index_cast %54 : i32 to index
      %c1_45 = arith.constant 1 : index
      %c0_46 = arith.constant 0 : index
      %56 = vector.load %arg13[%55, %c1_45, %c0_46] : memref<18x18x64xf32, #tpu.memory_space<vmem>>, vector<8x16x64xf32>
      tpu.vector_store %arg13[%55, %c1_45, %c0_46], %53 {strides = array<i32>} : memref<18x18x64xf32, #tpu.memory_space<vmem>>, vector<8x16x64xf32>,
    }
    %c2_i32_14 = arith.constant 2 : i32
    %c0_15 = arith.constant 0 : index
    %c0_16 = arith.constant 0 : index
    %10 = vector.load %arg5[%c0_15, %c0_16] : memref<1x64xf32, #tpu.memory_space<vmem>>, vector<1x64xf32>
    %11 = vector.shape_cast %10 : vector<1x64xf32> to vector<1x1x64xf32>
    %cst_17 = arith.constant 0.000000e+00 : f32
    %12 = vector.broadcast %cst_17 : f32 to vector<1x64xf32>
    %c0_i32_18 = arith.constant 0 : i32
    %c2_i32_19 = arith.constant 2 : i32
    %13 = arith.addi %c0_i32_18, %c2_i32_19 : i32
    %c1_i32_20 = arith.constant 1 : i32
    %14 = scf.for %arg15 = %c0_i32_18 to %13 step %c1_i32_20 iter_args(%arg16 = %12) -> (vector<1x64xf32>)  : i32 {
      %c8_i32 = arith.constant 8 : i32
      %38 = arith.muli %arg15, %c8_i32 : i32
      %cst_39 = arith.constant 0.000000e+00 : f32
      %39 = vector.broadcast %cst_39 : f32 to vector<8x16x64xf32>
      %c0_i32_40 = arith.constant 0 : i32
      %40 = arith.addi %38, %c0_i32_40 : i32
      %41 = arith.index_cast %40 : i32 to index
      %c0_41 = arith.constant 0 : index
      %c0_42 = arith.constant 0 : index
      %42 = vector.load %arg13[%41, %c0_41, %c0_42] : memref<18x18x64xf32, #tpu.memory_space<vmem>>, vector<8x16x64xf32>
      %c0_43 = arith.constant 0 : index
      %c0_44 = arith.constant 0 : index
      %43 = vector.load %arg4[%c0_43, %c0_44] : memref<9x64xf32, #tpu.memory_space<vmem>>, vector<1x64xf32>
      %44 = vector.shape_cast %43 : vector<1x64xf32> to vector<1x1x64xf32>
      %45 = vector.broadcast %44 : vector<1x1x64xf32> to vector<8x16x64xf32>
      %46 = arith.mulf %42, %45 : vector<8x16x64xf32>
      %47 = arith.addf %39, %46 : vector<8x16x64xf32>
      %c0_i32_45 = arith.constant 0 : i32
      %48 = arith.addi %38, %c0_i32_45 : i32
      %49 = arith.index_cast %48 : i32 to index
      %c1_46 = arith.constant 1 : index
      %c0_47 = arith.constant 0 : index
      %50 = vector.load %arg13[%49, %c1_46, %c0_47] : memref<18x18x64xf32, #tpu.memory_space<vmem>>, vector<8x16x64xf32>
      %c1_48 = arith.constant 1 : index
      %c0_49 = arith.constant 0 : index
      %51 = vector.load %arg4[%c1_48, %c0_49] : memref<9x64xf32, #tpu.memory_space<vmem>>, vector<1x64xf32>
      %52 = vector.shape_cast %51 : vector<1x64xf32> to vector<1x1x64xf32>
      %53 = vector.broadcast %52 : vector<1x1x64xf32> to vector<8x16x64xf32>
      %54 = arith.mulf %50, %53 : vector<8x16x64xf32>
      %55 = arith.addf %47, %54 : vector<8x16x64xf32>
      %c0_i32_50 = arith.constant 0 : i32
      %56 = arith.addi %38, %c0_i32_50 : i32
      %57 = arith.index_cast %56 : i32 to index
      %c2 = arith.constant 2 : index
      %c0_51 = arith.constant 0 : index
      %58 = vector.load %arg13[%57, %c2, %c0_51] : memref<18x18x64xf32, #tpu.memory_space<vmem>>, vector<8x16x64xf32>
      %c2_52 = arith.constant 2 : index
      %c0_53 = arith.constant 0 : index
      %59 = vector.load %arg4[%c2_52, %c0_53] : memref<9x64xf32, #tpu.memory_space<vmem>>, vector<1x64xf32>
      %60 = vector.shape_cast %59 : vector<1x64xf32> to vector<1x1x64xf32>
      %61 = vector.broadcast %60 : vector<1x1x64xf32> to vector<8x16x64xf32>
      %62 = arith.mulf %58, %61 : vector<8x16x64xf32>
      %63 = arith.addf %55, %62 : vector<8x16x64xf32>
      %c1_i32_54 = arith.constant 1 : i32
      %64 = arith.addi %38, %c1_i32_54 : i32
      %65 = arith.index_cast %64 : i32 to index
      %c0_55 = arith.constant 0 : index
      %c0_56 = arith.constant 0 : index
      %66 = vector.load %arg13[%65, %c0_55, %c0_56] : memref<18x18x64xf32, #tpu.memory_space<vmem>>, vector<8x16x64xf32>
      %c3 = arith.constant 3 : index
      %c0_57 = arith.constant 0 : index
      %67 = vector.load %arg4[%c3, %c0_57] : memref<9x64xf32, #tpu.memory_space<vmem>>, vector<1x64xf32>
      %68 = vector.shape_cast %67 : vector<1x64xf32> to vector<1x1x64xf32>
      %69 = vector.broadcast %68 : vector<1x1x64xf32> to vector<8x16x64xf32>
      %70 = arith.mulf %66, %69 : vector<8x16x64xf32>
      %71 = arith.addf %63, %70 : vector<8x16x64xf32>
      %c1_i32_58 = arith.constant 1 : i32
      %72 = arith.addi %38, %c1_i32_58 : i32
      %73 = arith.index_cast %72 : i32 to index
      %c1_59 = arith.constant 1 : index
      %c0_60 = arith.constant 0 : index
      %74 = vector.load %arg13[%73, %c1_59, %c0_60] : memref<18x18x64xf32, #tpu.memory_space<vmem>>, vector<8x16x64xf32>
      %c4 = arith.constant 4 : index
      %c0_61 = arith.constant 0 : index
      %75 = vector.load %arg4[%c4, %c0_61] : memref<9x64xf32, #tpu.memory_space<vmem>>, vector<1x64xf32>
      %76 = vector.shape_cast %75 : vector<1x64xf32> to vector<1x1x64xf32>
      %77 = vector.broadcast %76 : vector<1x1x64xf32> to vector<8x16x64xf32>
      %78 = arith.mulf %74, %77 : vector<8x16x64xf32>
      %79 = arith.addf %71, %78 : vector<8x16x64xf32>
      %c1_i32_62 = arith.constant 1 : i32
      %80 = arith.addi %38, %c1_i32_62 : i32
      %81 = arith.index_cast %80 : i32 to index
      %c2_63 = arith.constant 2 : index
      %c0_64 = arith.constant 0 : index
      %82 = vector.load %arg13[%81, %c2_63, %c0_64] : memref<18x18x64xf32, #tpu.memory_space<vmem>>, vector<8x16x64xf32>
      %c5 = arith.constant 5 : index
      %c0_65 = arith.constant 0 : index
      %83 = vector.load %arg4[%c5, %c0_65] : memref<9x64xf32, #tpu.memory_space<vmem>>, vector<1x64xf32>
      %84 = vector.shape_cast %83 : vector<1x64xf32> to vector<1x1x64xf32>
      %85 = vector.broadcast %84 : vector<1x1x64xf32> to vector<8x16x64xf32>
      %86 = arith.mulf %82, %85 : vector<8x16x64xf32>
      %87 = arith.addf %79, %86 : vector<8x16x64xf32>
      %c2_i32_66 = arith.constant 2 : i32
      %88 = arith.addi %38, %c2_i32_66 : i32
      %89 = arith.index_cast %88 : i32 to index
      %c0_67 = arith.constant 0 : index
      %c0_68 = arith.constant 0 : index
      %90 = vector.load %arg13[%89, %c0_67, %c0_68] : memref<18x18x64xf32, #tpu.memory_space<vmem>>, vector<8x16x64xf32>
      %c6 = arith.constant 6 : index
      %c0_69 = arith.constant 0 : index
      %91 = vector.load %arg4[%c6, %c0_69] : memref<9x64xf32, #tpu.memory_space<vmem>>, vector<1x64xf32>
      %92 = vector.shape_cast %91 : vector<1x64xf32> to vector<1x1x64xf32>
      %93 = vector.broadcast %92 : vector<1x1x64xf32> to vector<8x16x64xf32>
      %94 = arith.mulf %90, %93 : vector<8x16x64xf32>
      %95 = arith.addf %87, %94 : vector<8x16x64xf32>
      %c2_i32_70 = arith.constant 2 : i32
      %96 = arith.addi %38, %c2_i32_70 : i32
      %97 = arith.index_cast %96 : i32 to index
      %c1_71 = arith.constant 1 : index
      %c0_72 = arith.constant 0 : index
      %98 = vector.load %arg13[%97, %c1_71, %c0_72] : memref<18x18x64xf32, #tpu.memory_space<vmem>>, vector<8x16x64xf32>
      %c7 = arith.constant 7 : index
      %c0_73 = arith.constant 0 : index
      %99 = vector.load %arg4[%c7, %c0_73] : memref<9x64xf32, #tpu.memory_space<vmem>>, vector<1x64xf32>
      %100 = vector.shape_cast %99 : vector<1x64xf32> to vector<1x1x64xf32>
      %101 = vector.broadcast %100 : vector<1x1x64xf32> to vector<8x16x64xf32>
      %102 = arith.mulf %98, %101 : vector<8x16x64xf32>
      %103 = arith.addf %95, %102 : vector<8x16x64xf32>
      %c2_i32_74 = arith.constant 2 : i32
      %104 = arith.addi %38, %c2_i32_74 : i32
      %105 = arith.index_cast %104 : i32 to index
      %c2_75 = arith.constant 2 : index
      %c0_76 = arith.constant 0 : index
      %106 = vector.load %arg13[%105, %c2_75, %c0_76] : memref<18x18x64xf32, #tpu.memory_space<vmem>>, vector<8x16x64xf32>
      %c8 = arith.constant 8 : index
      %c0_77 = arith.constant 0 : index
      %107 = vector.load %arg4[%c8, %c0_77] : memref<9x64xf32, #tpu.memory_space<vmem>>, vector<1x64xf32>
      %108 = vector.shape_cast %107 : vector<1x64xf32> to vector<1x1x64xf32>
      %109 = vector.broadcast %108 : vector<1x1x64xf32> to vector<8x16x64xf32>
      %110 = arith.mulf %106, %109 : vector<8x16x64xf32>
      %111 = arith.addf %103, %110 : vector<8x16x64xf32>
      %112 = vector.broadcast %11 : vector<1x1x64xf32> to vector<8x16x64xf32>
      %113 = arith.addf %111, %112 : vector<8x16x64xf32>
      %114 = arith.negf %113 : vector<8x16x64xf32>
      %115 = math.exp %114 : vector<8x16x64xf32>
      %cst_78 = arith.constant 1.000000e+00 : f32
      %116 = vector.broadcast %cst_78 : f32 to vector<8x16x64xf32>
      %117 = arith.addf %116, %115 : vector<8x16x64xf32>
      %118 = arith.divf %116, %117 : vector<8x16x64xf32>
      %119 = arith.mulf %113, %118 : vector<8x16x64xf32>
      %120 = arith.index_cast %38 : i32 to index
      %c0_79 = arith.constant 0 : index
      %c0_80 = arith.constant 0 : index
      %121 = vector.load %arg14[%120, %c0_79, %c0_80] : memref<16x16x64xf32, #tpu.memory_space<vmem>>, vector<8x16x64xf32>
      tpu.vector_store %arg14[%120, %c0_79, %c0_80], %119 {strides = array<i32>} : memref<16x16x64xf32, #tpu.memory_space<vmem>>, vector<8x16x64xf32>,
      %122 = vector.shape_cast %119 : vector<8x16x64xf32> to vector<128x64xf32>
      %cst_81 = arith.constant dense<0.000000e+00> : vector<64xf32>
      %123 = vector.multi_reduction <add>, %122, %cst_81 [0] : vector<128x64xf32> to vector<64xf32>
      %124 = vector.shape_cast %123 : vector<64xf32> to vector<1x64xf32>
      %125 = arith.addf %arg16, %124 : vector<1x64xf32>
      scf.yield %125 : vector<1x64xf32>
    }
    %c2_i32_21 = arith.constant 2 : i32
    %cst_22 = arith.constant 3.906250e-03 : f32
    %15 = vector.broadcast %cst_22 : f32 to vector<1x64xf32>
    %16 = arith.mulf %14, %15 : vector<1x64xf32>
    %c0_23 = arith.constant 0 : index
    %c0_24 = arith.constant 0 : index
    %17 = vector.load %arg6[%c0_23, %c0_24] : memref<64x4xf32, #tpu.memory_space<vmem>>, vector<64x4xf32>
    %cst_25 = arith.constant dense<0.000000e+00> : vector<1x4xf32>
    %18 = tpu.matmul %16, %17, %cst_25 {dimension_numbers = #tpu.dot_dimension_numbers<[1], [0], [0], [1], [0, 0, 1, 1], [], []>} : vector<1x64xf32>, vector<64x4xf32>, vector<1x4xf32> -> vector<1x4xf32>
    %c0_26 = arith.constant 0 : index
    %c0_27 = arith.constant 0 : index
    %19 = vector.load %arg7[%c0_26, %c0_27] : memref<1x4xf32, #tpu.memory_space<vmem>>, vector<1x4xf32>
    %20 = arith.addf %18, %19 : vector<1x4xf32>
    %21 = arith.negf %20 : vector<1x4xf32>
    %22 = math.exp %21 : vector<1x4xf32>
    %cst_28 = arith.constant 1.000000e+00 : f32
    %23 = vector.broadcast %cst_28 : f32 to vector<1x4xf32>
    %24 = arith.addf %23, %22 : vector<1x4xf32>
    %25 = arith.divf %23, %24 : vector<1x4xf32>
    %26 = arith.mulf %20, %25 : vector<1x4xf32>
    %c0_29 = arith.constant 0 : index
    %c0_30 = arith.constant 0 : index
    %27 = vector.load %arg8[%c0_29, %c0_30] : memref<4x64xf32, #tpu.memory_space<vmem>>, vector<4x64xf32>
    %cst_31 = arith.constant dense<0.000000e+00> : vector<1x64xf32>
    %28 = tpu.matmul %26, %27, %cst_31 {dimension_numbers = #tpu.dot_dimension_numbers<[1], [0], [0], [1], [0, 0, 1, 1], [], []>} : vector<1x4xf32>, vector<4x64xf32>, vector<1x64xf32> -> vector<1x64xf32>
    %c0_32 = arith.constant 0 : index
    %c0_33 = arith.constant 0 : index
    %29 = vector.load %arg9[%c0_32, %c0_33] : memref<1x64xf32, #tpu.memory_space<vmem>>, vector<1x64xf32>
    %30 = arith.addf %28, %29 : vector<1x64xf32>
    %31 = arith.negf %30 : vector<1x64xf32>
    %32 = math.exp %31 : vector<1x64xf32>
    %cst_34 = arith.constant 1.000000e+00 : f32
    %33 = vector.broadcast %cst_34 : f32 to vector<1x64xf32>
    %34 = arith.addf %33, %32 : vector<1x64xf32>
    %35 = arith.divf %33, %34 : vector<1x64xf32>
    %36 = vector.shape_cast %35 : vector<1x64xf32> to vector<1x1x64xf32>
    %c0_i32_35 = arith.constant 0 : i32
    %c2_i32_36 = arith.constant 2 : i32
    %37 = arith.addi %c0_i32_35, %c2_i32_36 : i32
    %c1_i32_37 = arith.constant 1 : i32
    scf.for %arg15 = %c0_i32_35 to %37 step %c1_i32_37  : i32 {
      %c8_i32 = arith.constant 8 : i32
      %38 = arith.muli %arg15, %c8_i32 : i32
      %c16_i32 = arith.constant 16 : i32
      %39 = arith.muli %38, %c16_i32 : i32
      %40 = tpu.assume_multiple %39, 128 : i32
      %41 = arith.index_cast %38 : i32 to index
      %c0_39 = arith.constant 0 : index
      %c0_40 = arith.constant 0 : index
      %42 = vector.load %arg14[%41, %c0_39, %c0_40] : memref<16x16x64xf32, #tpu.memory_space<vmem>>, vector<8x16x64xf32>
      %43 = vector.broadcast %36 : vector<1x1x64xf32> to vector<8x16x64xf32>
      %44 = arith.mulf %42, %43 : vector<8x16x64xf32>
      %45 = vector.shape_cast %44 : vector<8x16x64xf32> to vector<128x64xf32>
      %c0_41 = arith.constant 0 : index
      %c0_42 = arith.constant 0 : index
      %46 = vector.load %arg10[%c0_41, %c0_42] : memref<16x64xf32, #tpu.memory_space<vmem>>, vector<16x64xf32>
      %cst_43 = arith.constant dense<0.000000e+00> : vector<16x128xf32>
      %47 = tpu.matmul %46, %45, %cst_43 {dimension_numbers = #tpu.dot_dimension_numbers<[1], [1], [0], [0], [0, 0, 1, 0], [], []>} : vector<16x64xf32>, vector<128x64xf32>, vector<16x128xf32> -> vector<16x128xf32>
      %c0_44 = arith.constant 0 : index
      %c0_45 = arith.constant 0 : index
      %48 = vector.load %arg11[%c0_44, %c0_45] : memref<16x1xf32, #tpu.memory_space<vmem>>, vector<16x1xf32>
      %49 = vector.broadcast %48 : vector<16x1xf32> to vector<16x128xf32>
      %50 = arith.addf %47, %49 : vector<16x128xf32>
      %c0_46 = arith.constant 0 : index
      %51 = arith.index_cast %40 : i32 to index
      %52 = vector.load %arg1[%c0_46, %51] : memref<16x256xf32, #tpu.memory_space<vmem>>, vector<16x128xf32>
      %53 = arith.addf %50, %52 : vector<16x128xf32>
      %c0_47 = arith.constant 0 : index
      %54 = arith.index_cast %40 : i32 to index
      %55 = vector.load %arg12[%c0_47, %54] : memref<16x256xf32, #tpu.memory_space<vmem>>, vector<16x128xf32>
      tpu.vector_store %arg12[%c0_47, %54], %53 {strides = array<i32>} : memref<16x256xf32, #tpu.memory_space<vmem>>, vector<16x128xf32>,
    }
    %c2_i32_38 = arith.constant 2 : i32
    return
  }
  func.func @transform_0(%arg0: i32) -> (i32, i32) {
    %c0_i32 = arith.constant 0 : i32
    %c0_i32_0 = arith.constant 0 : i32
    return %arg0, %c0_i32 : i32, i32
  }
  func.func @transform_1(%arg0: i32) -> (i32, i32) {
    %c0_i32 = arith.constant 0 : i32
    %c0_i32_0 = arith.constant 0 : i32
    %c0_i32_1 = arith.constant 0 : i32
    return %c0_i32, %c0_i32_0 : i32, i32
  }
  func.func @transform_2(%arg0: i32) -> (i32, i32) {
    %c0_i32 = arith.constant 0 : i32
    %c0_i32_0 = arith.constant 0 : i32
    %c0_i32_1 = arith.constant 0 : i32
    return %c0_i32, %c0_i32_0 : i32, i32
  }
  func.func @transform_3(%arg0: i32) -> (i32, i32) {
    %c0_i32 = arith.constant 0 : i32
    %c0_i32_0 = arith.constant 0 : i32
    %c0_i32_1 = arith.constant 0 : i32
    return %c0_i32, %c0_i32_0 : i32, i32
  }
  func.func @transform_4(%arg0: i32) -> (i32, i32) {
    %c0_i32 = arith.constant 0 : i32
    %c0_i32_0 = arith.constant 0 : i32
    %c0_i32_1 = arith.constant 0 : i32
    return %c0_i32, %c0_i32_0 : i32, i32
  }
  func.func @transform_5(%arg0: i32) -> (i32, i32) {
    %c0_i32 = arith.constant 0 : i32
    %c0_i32_0 = arith.constant 0 : i32
    %c0_i32_1 = arith.constant 0 : i32
    return %c0_i32, %c0_i32_0 : i32, i32
  }
  func.func @transform_6(%arg0: i32) -> (i32, i32) {
    %c0_i32 = arith.constant 0 : i32
    %c0_i32_0 = arith.constant 0 : i32
    %c0_i32_1 = arith.constant 0 : i32
    return %c0_i32, %c0_i32_0 : i32, i32
  }
  func.func @transform_7(%arg0: i32) -> (i32, i32) {
    %c0_i32 = arith.constant 0 : i32
    %c0_i32_0 = arith.constant 0 : i32
    %c0_i32_1 = arith.constant 0 : i32
    return %c0_i32, %c0_i32_0 : i32, i32
  }
  func.func @transform_8(%arg0: i32) -> (i32, i32) {
    %c0_i32 = arith.constant 0 : i32
    %c0_i32_0 = arith.constant 0 : i32
    %c0_i32_1 = arith.constant 0 : i32
    return %c0_i32, %c0_i32_0 : i32, i32
  }
  func.func @transform_9(%arg0: i32) -> (i32, i32) {
    %c0_i32 = arith.constant 0 : i32
    %c0_i32_0 = arith.constant 0 : i32
    %c0_i32_1 = arith.constant 0 : i32
    return %c0_i32, %c0_i32_0 : i32, i32
  }
  func.func @transform_10(%arg0: i32) -> (i32, i32) {
    %c0_i32 = arith.constant 0 : i32
    %c0_i32_0 = arith.constant 0 : i32
    %c0_i32_1 = arith.constant 0 : i32
    return %c0_i32, %c0_i32_0 : i32, i32
  }
  func.func @transform_11(%arg0: i32) -> (i32, i32) {
    %c0_i32 = arith.constant 0 : i32
    %c0_i32_0 = arith.constant 0 : i32
    return %arg0, %c0_i32 : i32, i32
  }
}

</mosaic_0001>

<llo_original>
// kernel: tile.36
$region0: #{tile.36}
  %s0 = inlined_call_operand.vmem [shape: f32[9,2,32], index: 0, kind: input, shape index: {}]
  %s1 = inlined_call_operand.vmem [shape: f32[9,64], index: 1, kind: output, shape index: {}]
  $region1: #{tile.36} parent=0
    #allocation0 [shape = 'u8[36864]{0}', space=vmem, size = 0x9000, scoped, tag = 'scoped mem for input reshape']
    %s3 = ssub.s32 4, 1
    %s4 = scalar_lea.vmem %s0, 16
    %v5 = vld [vmem:[%s4] sm:%s3]
    %s6 = scalar_lea.vmem [#allocation0], 64
    %7 = vst [vmem:[%s6] sm:%s3] %v5
    %s8 = scalar_lea.vmem %s0, 14
    %v9 = vld [vmem:[%s8] sm:%s3]
    %s10 = scalar_lea.vmem [#allocation0], 56
    %11 = vst [vmem:[%s10] sm:%s3] %v9
    %s12 = scalar_lea.vmem %s0, 12
    %v13 = vld [vmem:[%s12] sm:%s3]
    %s14 = scalar_lea.vmem [#allocation0], 48
    %15 = vst [vmem:[%s14] sm:%s3] %v13
    %s16 = scalar_lea.vmem %s0, 10
    %v17 = vld [vmem:[%s16] sm:%s3]
    %s18 = scalar_lea.vmem [#allocation0], 40
    %19 = vst [vmem:[%s18] sm:%s3] %v17
    %s20 = scalar_lea.vmem %s0, 8
    %v21 = vld [vmem:[%s20] sm:%s3]
    %s22 = scalar_lea.vmem [#allocation0], 32
    %23 = vst [vmem:[%s22] sm:%s3] %v21
    %s24 = scalar_lea.vmem %s0, 6
    %v25 = vld [vmem:[%s24] sm:%s3]
    %s26 = scalar_lea.vmem [#allocation0], 24
    %27 = vst [vmem:[%s26] sm:%s3] %v25
    %s28 = scalar_lea.vmem %s0, 4
    %v29 = vld [vmem:[%s28] sm:%s3]
    %s30 = scalar_lea.vmem [#allocation0], 16
    %31 = vst [vmem:[%s30] sm:%s3] %v29
    %s32 = scalar_lea.vmem %s0, 2
    %v33 = vld [vmem:[%s32] sm:%s3]
    %s34 = scalar_lea.vmem [#allocation0], 8
    %35 = vst [vmem:[%s34] sm:%s3] %v33
    %v36 = vld [vmem:[%s0] sm:%s3]
    %37 = vst [vmem:[#allocation0] sm:%s3] %v36
    %v38 = vld [vmem:[#allocation0] ss:$8 sm:$0xf]
    %v39 = vld [vmem:[#allocation0] ss:$8 sm:$0xf0]
    %vm40 = vcmask 1047556
    %v41 = vsel %vm40, %v39, %v38
    %vm42 = vcmask 261120
    %43 = vst.msk [vmem:[%s1] sm:$0xff] %vm42, %v41
    %s44 = scalar_lea.vmem [#allocation0], 64
    %v45 = vld [vmem:[%s44] sm:$0x1]
    %vm46 = vcmask 261120
    %s47 = scalar_lea.vmem %s1, 8
    %48 = vst.msk [vmem:[%s47] sm:$0x1] %vm46, %v45
    %s49 = scalar_lea.vmem [#allocation0], 1
    %v50 = vld [vmem:[%s49] ss:$8 sm:$0xf]
    %s51 = scalar_lea.vmem [#allocation0], 1
    %v52 = vld [vmem:[%s51] ss:$8 sm:$0xf0]
    %vm53 = vcmask 1047556
    %v54 = vsel %vm53, %v52, %v50
    %55 = vrot.lane.b32.xlu0 %v54, 32
    %v56 = vpop.permute.xlu0 %55
    %vm57 = vcmask 523520
    %58 = vst.msk [vmem:[%s1] sm:$0xff] %vm57, %v56
    %s59 = scalar_lea.vmem [#allocation0], 65
    %v60 = vld [vmem:[%s59] sm:$0x1]
    %61 = vrot.lane.b32.xlu0 %v60, 32
    %v62 = vpop.permute.xlu0 %61
    %vm63 = vcmask 523520
    %s64 = scalar_lea.vmem %s1, 8
    %65 = vst.msk [vmem:[%s64] sm:$0x1] %vm63, %v62

// kernel: mbconv_forward.1
$region0: #{mbconv_forward.1}
  #allocation0 [shape = 'u32[]', space=smem, size = 0x4, offset = 0x4, fixed_abs, tag = 'smem constant byte address 0x4 - core index']
  #allocation1 [shape = 'u32[72,128]{1,0:T(1,128)}', space=vmem, size = 0x9000, scoped, tag = 'internal scratch']
  #allocation2 [shape = 'f32[18,18,64]{2,1,0:T(8,128)}', space=vmem, size = 0x36000, scoped, tag = 'scratch operand']
  #allocation3 [shape = 'f32[16,16,64]{2,1,0:T(8,128)}', space=vmem, size = 0x20000, scoped, tag = 'scratch operand']
  %s0 = inlined_call_operand.vmem [shape: f32[16,256], index: 0, kind: input, shape index: {}]
  %s1 = inlined_call_operand.vmem [shape: f32[16,64], index: 1, kind: input, shape index: {}]
  %s2 = inlined_call_operand.vmem [shape: f32[1,64], index: 2, kind: input, shape index: {}]
  %s3 = inlined_call_operand.vmem [shape: f32[9,64], index: 3, kind: input, shape index: {}]
  %s4 = inlined_call_operand.vmem [shape: f32[1,64], index: 4, kind: input, shape index: {}]
  %s5 = inlined_call_operand.vmem [shape: f32[64,4], index: 5, kind: input, shape index: {}]
  %s6 = inlined_call_operand.vmem [shape: f32[1,4], index: 6, kind: input, shape index: {}]
  %s7 = inlined_call_operand.vmem [shape: f32[4,64], index: 7, kind: input, shape index: {}]
  %s8 = inlined_call_operand.vmem [shape: f32[1,64], index: 8, kind: input, shape index: {}]
  %s9 = inlined_call_operand.vmem [shape: f32[16,64], index: 9, kind: input, shape index: {}]
  %s10 = inlined_call_operand.vmem [shape: f32[16,1], index: 10, kind: input, shape index: {}]
  %s11 = inlined_call_operand.vmem [shape: f32[16,256], index: 11, kind: output, shape index: {}]
  %s12 = sld [smem:[#allocation0]]
  $region75: #{mbconv_forward.1} parent=0
    _
  %s14 = ssub.s32 1, %s12
  %s15 = scalar_select 0, %s14, %s12
  // Predicated region
  $region2: #{mbconv_forward.1} parent=0 // pred_check
    _
  $region3: #{mbconv_forward.1} parent=0 // pred_check_branch
    %17 = sbr.rel (0) target = $region5
  $region4: #{mbconv_forward.1} parent=0 // pred_region
    _
  $region5: #{mbconv_forward.1} parent=0 // pred_fallthru
    _
  // Predicated region
  $region6: #{mbconv_forward.1} parent=0 // pred_check
    _
  $region7: #{mbconv_forward.1} parent=0 // pred_check_branch
    %19 = sbr.rel (0) target = $region9
  $region8: #{mbconv_forward.1} parent=0 // pred_region
    _
  $region9: #{mbconv_forward.1} parent=0 // pred_fallthru
    _
  // Predicated region
  $region10: #{mbconv_forward.1} parent=0 // pred_check
    _
  $region11: #{mbconv_forward.1} parent=0 // pred_check_branch
    %21 = sbr.rel (0) target = $region13
  $region12: #{mbconv_forward.1} parent=0 // pred_region
    _
  $region13: #{mbconv_forward.1} parent=0 // pred_fallthru
    _
  // Predicated region
  $region14: #{mbconv_forward.1} parent=0 // pred_check
    _
  $region15: #{mbconv_forward.1} parent=0 // pred_check_branch
    %23 = sbr.rel (0) target = $region17
  $region16: #{mbconv_forward.1} parent=0 // pred_region
    _
  $region17: #{mbconv_forward.1} parent=0 // pred_fallthru
    _
  // Predicated region
  $region18: #{mbconv_forward.1} parent=0 // pred_check
    _
  $region19: #{mbconv_forward.1} parent=0 // pred_check_branch
    %25 = sbr.rel (0) target = $region21
  $region20: #{mbconv_forward.1} parent=0 // pred_region
    _
  $region21: #{mbconv_forward.1} parent=0 // pred_fallthru
    _
  // Predicated region
  $region22: #{mbconv_forward.1} parent=0 // pred_check
    _
  $region23: #{mbconv_forward.1} parent=0 // pred_check_branch
    %27 = sbr.rel (0) target = $region25
  $region24: #{mbconv_forward.1} parent=0 // pred_region
    _
  $region25: #{mbconv_forward.1} parent=0 // pred_fallthru
    _
  // Predicated region
  $region26: #{mbconv_forward.1} parent=0 // pred_check
    _
  $region27: #{mbconv_forward.1} parent=0 // pred_check_branch
    %29 = sbr.rel (0) target = $region29
  $region28: #{mbconv_forward.1} parent=0 // pred_region
    _
  $region29: #{mbconv_forward.1} parent=0 // pred_fallthru
    _
  // Predicated region
  $region30: #{mbconv_forward.1} parent=0 // pred_check
    _
  $region31: #{mbconv_forward.1} parent=0 // pred_check_branch
    %31 = sbr.rel (0) target = $region33
  $region32: #{mbconv_forward.1} parent=0 // pred_region
    _
  $region33: #{mbconv_forward.1} parent=0 // pred_fallthru
    _
  // Predicated region
  $region34: #{mbconv_forward.1} parent=0 // pred_check
    _
  $region35: #{mbconv_forward.1} parent=0 // pred_check_branch
    %33 = sbr.rel (0) target = $region37
  $region36: #{mbconv_forward.1} parent=0 // pred_region
    _
  $region37: #{mbconv_forward.1} parent=0 // pred_fallthru
    _
  // Predicated region
  $region38: #{mbconv_forward.1} parent=0 // pred_check
    _
  $region39: #{mbconv_forward.1} parent=0 // pred_check_branch
    %35 = sbr.rel (0) target = $region41
  $region40: #{mbconv_forward.1} parent=0 // pred_region
    _
  $region41: #{mbconv_forward.1} parent=0 // pred_fallthru
    _
  // Predicated region
  $region42: #{mbconv_forward.1} parent=0 // pred_check
    _
  $region43: #{mbconv_forward.1} parent=0 // pred_check_branch
    %37 = sbr.rel (0) target = $region45
  $region44: #{mbconv_forward.1} parent=0 // pred_region
    _
  $region45: #{mbconv_forward.1} parent=0 // pred_fallthru
    _
  %vm38 = vcmask 523264
  %39 = vst.msk [vmem:[#allocation2] sm:$0xff] %vm38, 0.0
  %40 = vst.msk [vmem:[#allocation2 + $0x8] sm:$0xff] %vm38, 0.0
  %vm41 = vcmask 517120
  %42 = vst.msk [vmem:[#allocation2 + $0x10] sm:$0x3] %vm41, 0.0
  %s43 = scalar_lea.vmem [#allocation2], 408
  %44 = vst.msk [vmem:[%s43] sm:$0xff] %vm38, 0.0
  %45 = vst.msk [vmem:[%s43 + $0x8] sm:$0xff] %vm38, 0.0
  %46 = vst.msk [vmem:[%s43 + $0x10] sm:$0x3] %vm41, 0.0
  %s47 = scalar_lea.vmem [#allocation2], 24
  %vm48 = vcmask 516096
  %49 = vst.msk [vmem:[%s47] sm:$0x1] %vm48, 0.0
  %50 = vst.msk [vmem:[%s47 + $0x18] sm:$0x1] %vm48, 0.0
  %51 = vst.msk [vmem:[%s47 + $0x30] sm:$0x1] %vm48, 0.0
  %52 = vst.msk [vmem:[%s47 + $0x48] sm:$0x1] %vm48, 0.0
  %53 = vst.msk [vmem:[%s47 + $0x60] sm:$0x1] %vm48, 0.0
  %54 = vst.msk [vmem:[%s47 + $0x78] sm:$0x1] %vm48, 0.0
  %55 = vst.msk [vmem:[%s47 + $0x90] sm:$0x1] %vm48, 0.0
  %56 = vst.msk [vmem:[%s47 + $0xa8] sm:$0x1] %vm48, 0.0
  %57 = vst.msk [vmem:[%s47 + $0xc0] sm:$0x1] %vm48, 0.0
  %58 = vst.msk [vmem:[%s47 + $0xd8] sm:$0x1] %vm48, 0.0
  %59 = vst.msk [vmem:[%s47 + $0xf0] sm:$0x1] %vm48, 0.0
  %60 = vst.msk [vmem:[%s47 + $0x108] sm:$0x1] %vm48, 0.0
  %61 = vst.msk [vmem:[%s47 + $0x120] sm:$0x1] %vm48, 0.0
  %62 = vst.msk [vmem:[%s47 + $0x138] sm:$0x1] %vm48, 0.0
  %63 = vst.msk [vmem:[%s47 + $0x150] sm:$0x1] %vm48, 0.0
  %64 = vst.msk [vmem:[%s47 + $0x168] sm:$0x1] %vm48, 0.0
  %65 = vst.msk [vmem:[%s47 + $0x11] sm:$0x1] %vm48, 0.0
  %66 = vst.msk [vmem:[%s47 + $0x29] sm:$0x1] %vm48, 0.0
  %67 = vst.msk [vmem:[%s47 + $0x41] sm:$0x1] %vm48, 0.0
  %68 = vst.msk [vmem:[%s47 + $0x59] sm:$0x1] %vm48, 0.0
  %69 = vst.msk [vmem:[%s47 + $0x71] sm:$0x1] %vm48, 0.0
  %70 = vst.msk [vmem:[%s47 + $0x89] sm:$0x1] %vm48, 0.0
  %71 = vst.msk [vmem:[%s47 + $0xa1] sm:$0x1] %vm48, 0.0
  %72 = vst.msk [vmem:[%s47 + $0xb9] sm:$0x1] %vm48, 0.0
  %73 = vst.msk [vmem:[%s47 + $0xd1] sm:$0x1] %vm48, 0.0
  %74 = vst.msk [vmem:[%s47 + $0xe9] sm:$0x1] %vm48, 0.0
  %75 = vst.msk [vmem:[%s47 + $0x101] sm:$0x1] %vm48, 0.0
  %76 = vst.msk [vmem:[%s47 + $0x119] sm:$0x1] %vm48, 0.0
  %77 = vst.msk [vmem:[%s47 + $0x131] sm:$0x1] %vm48, 0.0
  %78 = vst.msk [vmem:[%s47 + $0x149] sm:$0x1] %vm48, 0.0
  %79 = vst.msk [vmem:[%s47 + $0x161] sm:$0x1] %vm48, 0.0
  %80 = vst.msk [vmem:[%s47 + $0x179] sm:$0x1] %vm48, 0.0
  %v81 = vld [vmem:[%s2] sm:$0x1]
  loop: start=0, step=1, limit=2
  $region46: #{mbconv_forward.1} parent=0 // loop_pre_header
    _
  $region47: #{mbconv_forward.1} parent=0 // loop_header
    %s83 = sphi 0, %s87
    %p84 = scmp.ge.s32.totalorder %s83, 2
  $region48: #{mbconv_forward.1} parent=0 // loop_header_branch
    %86 = sbr.rel (%p84) target = $region52
  $region49: #{mbconv_forward.1} parent=0 // loop_body
    %s88 = smul.u32 %s83, 8
    %s89 = smul.u32 %s83, 128
    %s90 = sshra.s32 %s89, 7
    %s91 = sand.u32 %s89, 127
    %s92 = smul.addr %s90, 8
    %s93 = scalar_lea.vmem %s0, %s92
    %v94 = vld [vmem:[%s93] sm:$0xff]
    %v95 = vld [vmem:[%s93 + $0x10] sm:$0xff]
    %v96 = vld [vmem:[%s1] sm:$0xff]
    %v97 = vld [vmem:[%s1 + $0x8] sm:$0xff]
    %v99 = vperm.slane %v81, 0
    %101 = vxpose.xlu0.b32.start [1/16] %v94, 128
    %102 = vxpose.xlu0.b32.cont [2/16] %v95, 128
    %103 = vxpose.xlu0.b32.cont [3/16] 0.0, 128
    %104 = vxpose.xlu0.b32.cont [4/16] 0.0, 128
    %105 = vxpose.xlu0.b32.cont [5/16] 0.0, 128
    %106 = vxpose.xlu0.b32.cont [6/16] 0.0, 128
    %107 = vxpose.xlu0.b32.cont [7/16] 0.0, 128
    %108 = vxpose.xlu0.b32.cont [8/16] 0.0, 128
    %109 = vxpose.xlu0.b32.cont [9/16] 0.0, 128
    %110 = vxpose.xlu0.b32.cont [10/16] 0.0, 128
    %111 = vxpose.xlu0.b32.cont [11/16] 0.0, 128
    %112 = vxpose.xlu0.b32.cont [12/16] 0.0, 128
    %113 = vxpose.xlu0.b32.cont [13/16] 0.0, 128
    %114 = vxpose.xlu0.b32.cont [14/16] 0.0, 128
    %115 = vxpose.xlu0.b32.cont [15/16] 0.0, 128
    %116 = vxpose.xlu0.b32.end [16/16] 0.0, 128
    %v117 = vpop.trf.xlu0
    %v118 = vpop.trf.xlu0
    %v119 = vpop.trf.xlu0
    %v120 = vpop.trf.xlu0
    %v121 = vpop.trf.xlu0
    %v122 = vpop.trf.xlu0
    %v123 = vpop.trf.xlu0
    %v124 = vpop.trf.xlu0
    %v125 = vpop.trf.xlu0
    %v126 = vpop.trf.xlu0
    %v127 = vpop.trf.xlu0
    %v128 = vpop.trf.xlu0
    %v129 = vpop.trf.xlu0
    %v130 = vpop.trf.xlu0
    %v131 = vpop.trf.xlu0
    %v132 = vpop.trf.xlu0
    %vm133 = vcmask 130048
    %v135 = vsel %vm133, %v117, 0
    %v138 = vsel %vm133, %v118, 0
    %v141 = vsel %vm133, %v119, 0
    %v144 = vsel %vm133, %v120, 0
    %v147 = vsel %vm133, %v121, 0
    %v150 = vsel %vm133, %v122, 0
    %v153 = vsel %vm133, %v123, 0
    %v156 = vsel %vm133, %v124, 0
    %v159 = vsel %vm133, %v125, 0
    %v162 = vsel %vm133, %v126, 0
    %v165 = vsel %vm133, %v127, 0
    %v168 = vsel %vm133, %v128, 0
    %v171 = vsel %vm133, %v129, 0
    %v174 = vsel %vm133, %v130, 0
    %v177 = vsel %vm133, %v131, 0
    %v180 = vsel %vm133, %v132, 0
    %182 = vmatpush.msra.mxu0 0.0
    %183 = vmatpush.msra.mxu0 0.0
    %184 = vmatpush.msra.mxu0 0.0
    %185 = vmatpush.msra.mxu0 0.0
    %186 = vmatpush.msra.mxu0 0.0
    %187 = vmatpush.msra.mxu0 0.0
    %188 = vmatpush.msra.mxu0 0.0
    %189 = vmatpush.msra.mxu0 0.0
    %190 = vmatpush.msra.mxu0 0.0
    %191 = vmatpush.msra.mxu0 0.0
    %192 = vmatpush.msra.mxu0 0.0
    %193 = vmatpush.msra.mxu0 0.0
    %194 = vmatpush.msra.mxu0 0.0
    %195 = vmatpush.msra.mxu0 0.0
    %196 = vmatpush.msra.mxu0 %v97
    %197 = vmatpush.msra.mxu0 %v96
    %198 = vmatmul.f32.gmra.mxu0 %v135
    %v199 = vpop.f32.mrf.mxu0
    %v200 = vadd.f32 %v99, %v199
    %201 = vmatmul.f32.gmra.mxu0 %v138
    %v202 = vpop.f32.mrf.mxu0
    %v203 = vadd.f32 %v99, %v202
    %204 = vmatmul.f32.gmra.mxu0 %v141
    %v205 = vpop.f32.mrf.mxu0
    %v206 = vadd.f32 %v99, %v205
    %207 = vmatmul.f32.gmra.mxu0 %v144
    %v208 = vpop.f32.mrf.mxu0
    %v209 = vadd.f32 %v99, %v208
    %210 = vmatmul.f32.gmra.mxu0 %v147
    %v211 = vpop.f32.mrf.mxu0
    %v212 = vadd.f32 %v99, %v211
    %213 = vmatmul.f32.gmra.mxu0 %v150
    %v214 = vpop.f32.mrf.mxu0
    %v215 = vadd.f32 %v99, %v214
    %216 = vmatmul.f32.gmra.mxu0 %v153
    %v217 = vpop.f32.mrf.mxu0
    %v218 = vadd.f32 %v99, %v217
    %219 = vmatmul.f32.gmra.mxu0 %v156
    %v220 = vpop.f32.mrf.mxu0
    %v221 = vadd.f32 %v99, %v220
    %222 = vmatmul.f32.gmra.mxu0 %v159
    %v223 = vpop.f32.mrf.mxu0
    %v224 = vadd.f32 %v99, %v223
    %225 = vmatmul.f32.gmra.mxu0 %v162
    %v226 = vpop.f32.mrf.mxu0
    %v227 = vadd.f32 %v99, %v226
    %228 = vmatmul.f32.gmra.mxu0 %v165
    %v229 = vpop.f32.mrf.mxu0
    %v230 = vadd.f32 %v99, %v229
    %231 = vmatmul.f32.gmra.mxu0 %v168
    %v232 = vpop.f32.mrf.mxu0
    %v233 = vadd.f32 %v99, %v232
    %234 = vmatmul.f32.gmra.mxu0 %v171
    %v235 = vpop.f32.mrf.mxu0
    %v236 = vadd.f32 %v99, %v235
    %237 = vmatmul.f32.gmra.mxu0 %v174
    %v238 = vpop.f32.mrf.mxu0
    %v239 = vadd.f32 %v99, %v238
    %240 = vmatmul.f32.gmra.mxu0 %v177
    %v241 = vpop.f32.mrf.mxu0
    %v242 = vadd.f32 %v99, %v241
    %243 = vmatmul.f32.gmra.mxu0 %v180
    %v244 = vpop.f32.mrf.mxu0
    %v245 = vadd.f32 %v99, %v244
    %246 = vdwg.mxu0
    %v247 = vxor.u32 %v200, 2147483648
    %v248 = vxor.u32 %v203, 2147483648
    %v249 = vxor.u32 %v206, 2147483648
    %v250 = vxor.u32 %v209, 2147483648
    %v251 = vxor.u32 %v212, 2147483648
    %v252 = vxor.u32 %v215, 2147483648
    %v253 = vxor.u32 %v218, 2147483648
    %v254 = vxor.u32 %v221, 2147483648
    %v255 = vxor.u32 %v224, 2147483648
    %v256 = vxor.u32 %v227, 2147483648
    %v257 = vxor.u32 %v230, 2147483648
    %v258 = vxor.u32 %v233, 2147483648
    %v259 = vxor.u32 %v236, 2147483648
    %v260 = vxor.u32 %v239, 2147483648
    %v261 = vxor.u32 %v242, 2147483648
    %v262 = vxor.u32 %v245, 2147483648
    %v263 = vmul.f32 %v247, 1.442695
    %v264 = vpow.pop %v263
    %v265 = vmul.f32 %v248, 1.442695
    %v266 = vpow.pop %v265
    %v267 = vmul.f32 %v249, 1.442695
    %v268 = vpow.pop %v267
    %v269 = vmul.f32 %v250, 1.442695
    %v270 = vpow.pop %v269
    %v271 = vmul.f32 %v251, 1.442695
    %v272 = vpow.pop %v271
    %v273 = vmul.f32 %v252, 1.442695
    %v274 = vpow.pop %v273
    %v275 = vmul.f32 %v253, 1.442695
    %v276 = vpow.pop %v275
    %v277 = vmul.f32 %v254, 1.442695
    %v278 = vpow.pop %v277
    %v279 = vmul.f32 %v255, 1.442695
    %v280 = vpow.pop %v279
    %v281 = vmul.f32 %v256, 1.442695
    %v282 = vpow.pop %v281
    %v283 = vmul.f32 %v257, 1.442695
    %v284 = vpow.pop %v283
    %v285 = vmul.f32 %v258, 1.442695
    %v286 = vpow.pop %v285
    %v287 = vmul.f32 %v259, 1.442695
    %v288 = vpow.pop %v287
    %v289 = vmul.f32 %v260, 1.442695
    %v290 = vpow.pop %v289
    %v291 = vmul.f32 %v261, 1.442695
    %v292 = vpow.pop %v291
    %v293 = vmul.f32 %v262, 1.442695
    %v294 = vpow.pop %v293
    %v295 = vadd.f32 %v264, 1.0
    %v296 = vadd.f32 %v266, 1.0
    %v297 = vadd.f32 %v268, 1.0
    %v298 = vadd.f32 %v270, 1.0
    %v299 = vadd.f32 %v272, 1.0
    %v300 = vadd.f32 %v274, 1.0
    %v301 = vadd.f32 %v276, 1.0
    %v302 = vadd.f32 %v278, 1.0
    %v303 = vadd.f32 %v280, 1.0
    %v304 = vadd.f32 %v282, 1.0
    %v305 = vadd.f32 %v284, 1.0
    %v306 = vadd.f32 %v286, 1.0
    %v307 = vadd.f32 %v288, 1.0
    %v308 = vadd.f32 %v290, 1.0
    %v309 = vadd.f32 %v292, 1.0
    %v310 = vadd.f32 %v294, 1.0
    %v311 = vrcp.pop %v295
    %v312 = vmul.f32 %v295, %v311
    %v313 = vsub.f32 1.0, %v312
    %v314 = vmul.f32 %v311, %v313
    %v315 = vadd.f32 %v311, %v314
    %vm316 = vweird.f32 %v295
    %vm317 = vweird.f32 %v311
    %vm318 = vmor %vm316, %vm317
    %v319 = vsel %vm318, %v311, %v315
    %v320 = vand.u32 2147483647, %v295
    %vm321 = vcmp.eq.f32.partialorder %v320, 8.507059e+37
    %v322 = vand.u32 %v295, 2147483648
    %v323 = vor.u32 1.1754944e-38, %v322
    %v324 = vsel %vm321, %v323, %v319
    %v325 = vmul.f32 1.0, %v324
    %v326 = vrcp.pop %v296
    %v327 = vmul.f32 %v296, %v326
    %v328 = vsub.f32 1.0, %v327
    %v329 = vmul.f32 %v326, %v328
    %v330 = vadd.f32 %v326, %v329
    %vm331 = vweird.f32 %v296
    %vm332 = vweird.f32 %v326
    %vm333 = vmor %vm331, %vm332
    %v334 = vsel %vm333, %v326, %v330
    %v335 = vand.u32 2147483647, %v296
    %vm336 = vcmp.eq.f32.partialorder %v335, 8.507059e+37
    %v337 = vand.u32 %v296, 2147483648
    %v338 = vor.u32 1.1754944e-38, %v337
    %v339 = vsel %vm336, %v338, %v334
    %v340 = vmul.f32 1.0, %v339
    %v341 = vrcp.pop %v297
    %v342 = vmul.f32 %v297, %v341
    %v343 = vsub.f32 1.0, %v342
    %v344 = vmul.f32 %v341, %v343
    %v345 = vadd.f32 %v341, %v344
    %vm346 = vweird.f32 %v297
    %vm347 = vweird.f32 %v341
    %vm348 = vmor %vm346, %vm347
    %v349 = vsel %vm348, %v341, %v345
    %v350 = vand.u32 2147483647, %v297
    %vm351 = vcmp.eq.f32.partialorder %v350, 8.507059e+37
    %v352 = vand.u32 %v297, 2147483648
    %v353 = vor.u32 1.1754944e-38, %v352
    %v354 = vsel %vm351, %v353, %v349
    %v355 = vmul.f32 1.0, %v354
    %v356 = vrcp.pop %v298
    %v357 = vmul.f32 %v298, %v356
    %v358 = vsub.f32 1.0, %v357
    %v359 = vmul.f32 %v356, %v358
    %v360 = vadd.f32 %v356, %v359
    %vm361 = vweird.f32 %v298
    %vm362 = vweird.f32 %v356
    %vm363 = vmor %vm361, %vm362
    %v364 = vsel %vm363, %v356, %v360
    %v365 = vand.u32 2147483647, %v298
    %vm366 = vcmp.eq.f32.partialorder %v365, 8.507059e+37
    %v367 = vand.u32 %v298, 2147483648
    %v368 = vor.u32 1.1754944e-38, %v367
    %v369 = vsel %vm366, %v368, %v364
    %v370 = vmul.f32 1.0, %v369
    %v371 = vrcp.pop %v299
    %v372 = vmul.f32 %v299, %v371
    %v373 = vsub.f32 1.0, %v372
    %v374 = vmul.f32 %v371, %v373
    %v375 = vadd.f32 %v371, %v374
    %vm376 = vweird.f32 %v299
    %vm377 = vweird.f32 %v371
    %vm378 = vmor %vm376, %vm377
    %v379 = vsel %vm378, %v371, %v375
    %v380 = vand.u32 2147483647, %v299
    %vm381 = vcmp.eq.f32.partialorder %v380, 8.507059e+37
    %v382 = vand.u32 %v299, 2147483648
    %v383 = vor.u32 1.1754944e-38, %v382
    %v384 = vsel %vm381, %v383, %v379
    %v385 = vmul.f32 1.0, %v384
    %v386 = vrcp.pop %v300
    %v387 = vmul.f32 %v300, %v386
    %v388 = vsub.f32 1.0, %v387
    %v389 = vmul.f32 %v386, %v388
    %v390 = vadd.f32 %v386, %v389
    %vm391 = vweird.f32 %v300
    %vm392 = vweird.f32 %v386
    %vm393 = vmor %vm391, %vm392
    %v394 = vsel %vm393, %v386, %v390
    %v395 = vand.u32 2147483647, %v300
    %vm396 = vcmp.eq.f32.partialorder %v395, 8.507059e+37
    %v397 = vand.u32 %v300, 2147483648
    %v398 = vor.u32 1.1754944e-38, %v397
    %v399 = vsel %vm396, %v398, %v394
    %v400 = vmul.f32 1.0, %v399
    %v401 = vrcp.pop %v301
    %v402 = vmul.f32 %v301, %v401
    %v403 = vsub.f32 1.0, %v402
    %v404 = vmul.f32 %v401, %v403
    %v405 = vadd.f32 %v401, %v404
    %vm406 = vweird.f32 %v301
    %vm407 = vweird.f32 %v401
    %vm408 = vmor %vm406, %vm407
    %v409 = vsel %vm408, %v401, %v405
    %v410 = vand.u32 2147483647, %v301
    %vm411 = vcmp.eq.f32.partialorder %v410, 8.507059e+37
    %v412 = vand.u32 %v301, 2147483648
    %v413 = vor.u32 1.1754944e-38, %v412
    %v414 = vsel %vm411, %v413, %v409
    %v415 = vmul.f32 1.0, %v414
    %v416 = vrcp.pop %v302
    %v417 = vmul.f32 %v302, %v416
    %v418 = vsub.f32 1.0, %v417
    %v419 = vmul.f32 %v416, %v418
    %v420 = vadd.f32 %v416, %v419
    %vm421 = vweird.f32 %v302
    %vm422 = vweird.f32 %v416
    %vm423 = vmor %vm421, %vm422
    %v424 = vsel %vm423, %v416, %v420
    %v425 = vand.u32 2147483647, %v302
    %vm426 = vcmp.eq.f32.partialorder %v425, 8.507059e+37
    %v427 = vand.u32 %v302, 2147483648
    %v428 = vor.u32 1.1754944e-38, %v427
    %v429 = vsel %vm426, %v428, %v424
    %v430 = vmul.f32 1.0, %v429
    %v431 = vrcp.pop %v303
    %v432 = vmul.f32 %v303, %v431
    %v433 = vsub.f32 1.0, %v432
    %v434 = vmul.f32 %v431, %v433
    %v435 = vadd.f32 %v431, %v434
    %vm436 = vweird.f32 %v303
    %vm437 = vweird.f32 %v431
    %vm438 = vmor %vm436, %vm437
    %v439 = vsel %vm438, %v431, %v435
    %v440 = vand.u32 2147483647, %v303
    %vm441 = vcmp.eq.f32.partialorder %v440, 8.507059e+37
    %v442 = vand.u32 %v303, 2147483648
    %v443 = vor.u32 1.1754944e-38, %v442
    %v444 = vsel %vm441, %v443, %v439
    %v445 = vmul.f32 1.0, %v444
    %v446 = vrcp.pop %v304
    %v447 = vmul.f32 %v304, %v446
    %v448 = vsub.f32 1.0, %v447
    %v449 = vmul.f32 %v446, %v448
    %v450 = vadd.f32 %v446, %v449
    %vm451 = vweird.f32 %v304
    %vm452 = vweird.f32 %v446
    %vm453 = vmor %vm451, %vm452
    %v454 = vsel %vm453, %v446, %v450
    %v455 = vand.u32 2147483647, %v304
    %vm456 = vcmp.eq.f32.partialorder %v455, 8.507059e+37
    %v457 = vand.u32 %v304, 2147483648
    %v458 = vor.u32 1.1754944e-38, %v457
    %v459 = vsel %vm456, %v458, %v454
    %v460 = vmul.f32 1.0, %v459
    %v461 = vrcp.pop %v305
    %v462 = vmul.f32 %v305, %v461
    %v463 = vsub.f32 1.0, %v462
    %v464 = vmul.f32 %v461, %v463
    %v465 = vadd.f32 %v461, %v464
    %vm466 = vweird.f32 %v305
    %vm467 = vweird.f32 %v461
    %vm468 = vmor %vm466, %vm467
    %v469 = vsel %vm468, %v461, %v465
    %v470 = vand.u32 2147483647, %v305
    %vm471 = vcmp.eq.f32.partialorder %v470, 8.507059e+37
    %v472 = vand.u32 %v305, 2147483648
    %v473 = vor.u32 1.1754944e-38, %v472
    %v474 = vsel %vm471, %v473, %v469
    %v475 = vmul.f32 1.0, %v474
    %v476 = vrcp.pop %v306
    %v477 = vmul.f32 %v306, %v476
    %v478 = vsub.f32 1.0, %v477
    %v479 = vmul.f32 %v476, %v478
    %v480 = vadd.f32 %v476, %v479
    %vm481 = vweird.f32 %v306
    %vm482 = vweird.f32 %v476
    %vm483 = vmor %vm481, %vm482
    %v484 = vsel %vm483, %v476, %v480
    %v485 = vand.u32 2147483647, %v306
    %vm486 = vcmp.eq.f32.partialorder %v485, 8.507059e+37
    %v487 = vand.u32 %v306, 2147483648
    %v488 = vor.u32 1.1754944e-38, %v487
    %v489 = vsel %vm486, %v488, %v484
    %v490 = vmul.f32 1.0, %v489
    %v491 = vrcp.pop %v307
    %v492 = vmul.f32 %v307, %v491
    %v493 = vsub.f32 1.0, %v492
    %v494 = vmul.f32 %v491, %v493
    %v495 = vadd.f32 %v491, %v494
    %vm496 = vweird.f32 %v307
    %vm497 = vweird.f32 %v491
    %vm498 = vmor %vm496, %vm497
    %v499 = vsel %vm498, %v491, %v495
    %v500 = vand.u32 2147483647, %v307
    %vm501 = vcmp.eq.f32.partialorder %v500, 8.507059e+37
    %v502 = vand.u32 %v307, 2147483648
    %v503 = vor.u32 1.1754944e-38, %v502
    %v504 = vsel %vm501, %v503, %v499
    %v505 = vmul.f32 1.0, %v504
    %v506 = vrcp.pop %v308
    %v507 = vmul.f32 %v308, %v506
    %v508 = vsub.f32 1.0, %v507
    %v509 = vmul.f32 %v506, %v508
    %v510 = vadd.f32 %v506, %v509
    %vm511 = vweird.f32 %v308
    %vm512 = vweird.f32 %v506
    %vm513 = vmor %vm511, %vm512
    %v514 = vsel %vm513, %v506, %v510
    %v515 = vand.u32 2147483647, %v308
    %vm516 = vcmp.eq.f32.partialorder %v515, 8.507059e+37
    %v517 = vand.u32 %v308, 2147483648
    %v518 = vor.u32 1.1754944e-38, %v517
    %v519 = vsel %vm516, %v518, %v514
    %v520 = vmul.f32 1.0, %v519
    %v521 = vrcp.pop %v309
    %v522 = vmul.f32 %v309, %v521
    %v523 = vsub.f32 1.0, %v522
    %v524 = vmul.f32 %v521, %v523
    %v525 = vadd.f32 %v521, %v524
    %vm526 = vweird.f32 %v309
    %vm527 = vweird.f32 %v521
    %vm528 = vmor %vm526, %vm527
    %v529 = vsel %vm528, %v521, %v525
    %v530 = vand.u32 2147483647, %v309
    %vm531 = vcmp.eq.f32.partialorder %v530, 8.507059e+37
    %v532 = vand.u32 %v309, 2147483648
    %v533 = vor.u32 1.1754944e-38, %v532
    %v534 = vsel %vm531, %v533, %v529
    %v535 = vmul.f32 1.0, %v534
    %v536 = vrcp.pop %v310
    %v537 = vmul.f32 %v310, %v536
    %v538 = vsub.f32 1.0, %v537
    %v539 = vmul.f32 %v536, %v538
    %v540 = vadd.f32 %v536, %v539
    %vm541 = vweird.f32 %v310
    %vm542 = vweird.f32 %v536
    %vm543 = vmor %vm541, %vm542
    %v544 = vsel %vm543, %v536, %v540
    %v545 = vand.u32 2147483647, %v310
    %vm546 = vcmp.eq.f32.partialorder %v545, 8.507059e+37
    %v547 = vand.u32 %v310, 2147483648
    %v548 = vor.u32 1.1754944e-38, %v547
    %v549 = vsel %vm546, %v548, %v544
    %v550 = vmul.f32 1.0, %v549
    %v551 = vmul.f32 %v200, %v325
    %v552 = vmul.f32 %v203, %v340
    %v553 = vmul.f32 %v206, %v355
    %v554 = vmul.f32 %v209, %v370
    %v555 = vmul.f32 %v212, %v385
    %v556 = vmul.f32 %v215, %v400
    %v557 = vmul.f32 %v218, %v415
    %v558 = vmul.f32 %v221, %v430
    %v559 = vmul.f32 %v224, %v445
    %v560 = vmul.f32 %v227, %v460
    %v561 = vmul.f32 %v230, %v475
    %v562 = vmul.f32 %v233, %v490
    %v563 = vmul.f32 %v236, %v505
    %v564 = vmul.f32 %v239, %v520
    %v565 = vmul.f32 %v242, %v535
    %v566 = vmul.f32 %v245, %v550
    %s567 = sadd.s32 %s88, 1
    %s568 = smul.u32 %s567, 24
    %s569 = scalar_lea.vmem [#allocation2], %s568
    %570 = vst.msk [vmem:[%s569 + $0x1] sm:$0xff] %vm38, %v551
    %571 = vst.msk [vmem:[%s569 + $0x9] sm:$0xff] %vm38, %v552
    %572 = vst.msk [vmem:[%s569 + $0x19] sm:$0xff] %vm38, %v553
    %573 = vst.msk [vmem:[%s569 + $0x21] sm:$0xff] %vm38, %v554
    %574 = vst.msk [vmem:[%s569 + $0x31] sm:$0xff] %vm38, %v555
    %575 = vst.msk [vmem:[%s569 + $0x39] sm:$0xff] %vm38, %v556
    %576 = vst.msk [vmem:[%s569 + $0x49] sm:$0xff] %vm38, %v557
    %577 = vst.msk [vmem:[%s569 + $0x51] sm:$0xff] %vm38, %v558
    %578 = vst.msk [vmem:[%s569 + $0x61] sm:$0xff] %vm38, %v559
    %579 = vst.msk [vmem:[%s569 + $0x69] sm:$0xff] %vm38, %v560
    %580 = vst.msk [vmem:[%s569 + $0x79] sm:$0xff] %vm38, %v561
    %581 = vst.msk [vmem:[%s569 + $0x81] sm:$0xff] %vm38, %v562
    %582 = vst.msk [vmem:[%s569 + $0x91] sm:$0xff] %vm38, %v563
    %583 = vst.msk [vmem:[%s569 + $0x99] sm:$0xff] %vm38, %v564
    %584 = vst.msk [vmem:[%s569 + $0xa9] sm:$0xff] %vm38, %v565
    %585 = vst.msk [vmem:[%s569 + $0xb1] sm:$0xff] %vm38, %v566
  $region50: #{mbconv_forward.1} parent=0 // loop_footer
    %s87 = sadd.s32 1, %s83
  $region51: #{mbconv_forward.1} parent=0 // loop_footer_branch
    %82 = sbr.rel target = $region47
  $region52: #{mbconv_forward.1} parent=0 // loop_exit
    _
  %v586 = vld [vmem:[%s4] sm:$0x1]
  loop: start=0, step=1, limit=2
  $region53: #{mbconv_forward.1} parent=0 // loop_pre_header
    _
  $region54: #{mbconv_forward.1} parent=0 // loop_header
    %s588 = sphi 0, %s592
    %p589 = scmp.ge.s32.totalorder %s588, 2
    %v593 = vphi 0.0, %v1447
  $region55: #{mbconv_forward.1} parent=0 // loop_header_branch
    %591 = sbr.rel (%p589) target = $region59
  $region56: #{mbconv_forward.1} parent=0 // loop_body
    %s594 = smul.u32 %s588, 8
    %s595 = smul.u32 %s594, 24
    %s596 = scalar_lea.vmem [#allocation2], %s595
    %v597 = vld [vmem:[%s596] sm:$0xff]
    %v598 = vld [vmem:[%s596 + $0x8] sm:$0xff]
    %v599 = vld [vmem:[%s596 + $0x18] sm:$0xff]
    %v600 = vld [vmem:[%s596 + $0x20] sm:$0xff]
    %v601 = vld [vmem:[%s596 + $0x30] sm:$0xff]
    %v602 = vld [vmem:[%s596 + $0x38] sm:$0xff]
    %v603 = vld [vmem:[%s596 + $0x48] sm:$0xff]
    %v604 = vld [vmem:[%s596 + $0x50] sm:$0xff]
    %v605 = vld [vmem:[%s596 + $0x60] sm:$0xff]
    %v606 = vld [vmem:[%s596 + $0x68] sm:$0xff]
    %v607 = vld [vmem:[%s596 + $0x78] sm:$0xff]
    %v608 = vld [vmem:[%s596 + $0x80] sm:$0xff]
    %v609 = vld [vmem:[%s596 + $0x90] sm:$0xff]
    %v610 = vld [vmem:[%s596 + $0x98] sm:$0xff]
    %v611 = vld [vmem:[%s596 + $0xa8] sm:$0xff]
    %v612 = vld [vmem:[%s596 + $0xb0] sm:$0xff]
    %v613 = vld [vmem:[%s3] sm:$0x1]
    %v614 = vperm.slane %v613, 0
    %v615 = vmul.f32 %v597, %v614
    %v616 = vmul.f32 %v598, %v614
    %v617 = vmul.f32 %v599, %v614
    %v618 = vmul.f32 %v600, %v614
    %v619 = vmul.f32 %v601, %v614
    %v620 = vmul.f32 %v602, %v614
    %v621 = vmul.f32 %v603, %v614
    %v622 = vmul.f32 %v604, %v614
    %v623 = vmul.f32 %v605, %v614
    %v624 = vmul.f32 %v606, %v614
    %v625 = vmul.f32 %v607, %v614
    %v626 = vmul.f32 %v608, %v614
    %v627 = vmul.f32 %v609, %v614
    %v628 = vmul.f32 %v610, %v614
    %v629 = vmul.f32 %v611, %v614
    %v630 = vmul.f32 %v612, %v614
    %v631 = vadd.f32 %v615, 0.0
    %v632 = vadd.f32 %v616, 0.0
    %v633 = vadd.f32 %v617, 0.0
    %v634 = vadd.f32 %v618, 0.0
    %v635 = vadd.f32 %v619, 0.0
    %v636 = vadd.f32 %v620, 0.0
    %v637 = vadd.f32 %v621, 0.0
    %v638 = vadd.f32 %v622, 0.0
    %v639 = vadd.f32 %v623, 0.0
    %v640 = vadd.f32 %v624, 0.0
    %v641 = vadd.f32 %v625, 0.0
    %v642 = vadd.f32 %v626, 0.0
    %v643 = vadd.f32 %v627, 0.0
    %v644 = vadd.f32 %v628, 0.0
    %v645 = vadd.f32 %v629, 0.0
    %v646 = vadd.f32 %v630, 0.0
    %v647 = vld [vmem:[%s596 + $0x1] sm:$0xff]
    %v648 = vld [vmem:[%s596 + $0x9] sm:$0xff]
    %v649 = vld [vmem:[%s596 + $0x19] sm:$0xff]
    %v650 = vld [vmem:[%s596 + $0x21] sm:$0xff]
    %v651 = vld [vmem:[%s596 + $0x31] sm:$0xff]
    %v652 = vld [vmem:[%s596 + $0x39] sm:$0xff]
    %v653 = vld [vmem:[%s596 + $0x49] sm:$0xff]
    %v654 = vld [vmem:[%s596 + $0x51] sm:$0xff]
    %v655 = vld [vmem:[%s596 + $0x61] sm:$0xff]
    %v656 = vld [vmem:[%s596 + $0x69] sm:$0xff]
    %v657 = vld [vmem:[%s596 + $0x79] sm:$0xff]
    %v658 = vld [vmem:[%s596 + $0x81] sm:$0xff]
    %v659 = vld [vmem:[%s596 + $0x91] sm:$0xff]
    %v660 = vld [vmem:[%s596 + $0x99] sm:$0xff]
    %v661 = vld [vmem:[%s596 + $0xa9] sm:$0xff]
    %v662 = vld [vmem:[%s596 + $0xb1] sm:$0xff]
    %v663 = vld [vmem:[%s3 + $0x1] sm:$0x1]
    %v664 = vperm.slane %v663, 0
    %v665 = vmul.f32 %v647, %v664
    %v666 = vmul.f32 %v648, %v664
    %v667 = vmul.f32 %v649, %v664
    %v668 = vmul.f32 %v650, %v664
    %v669 = vmul.f32 %v651, %v664
    %v670 = vmul.f32 %v652, %v664
    %v671 = vmul.f32 %v653, %v664
    %v672 = vmul.f32 %v654, %v664
    %v673 = vmul.f32 %v655, %v664
    %v674 = vmul.f32 %v656, %v664
    %v675 = vmul.f32 %v657, %v664
    %v676 = vmul.f32 %v658, %v664
    %v677 = vmul.f32 %v659, %v664
    %v678 = vmul.f32 %v660, %v664
    %v679 = vmul.f32 %v661, %v664
    %v680 = vmul.f32 %v662, %v664
    %v681 = vadd.f32 %v631, %v665
    %v682 = vadd.f32 %v632, %v666
    %v683 = vadd.f32 %v633, %v667
    %v684 = vadd.f32 %v634, %v668
    %v685 = vadd.f32 %v635, %v669
    %v686 = vadd.f32 %v636, %v670
    %v687 = vadd.f32 %v637, %v671
    %v688 = vadd.f32 %v638, %v672
    %v689 = vadd.f32 %v639, %v673
    %v690 = vadd.f32 %v640, %v674
    %v691 = vadd.f32 %v641, %v675
    %v692 = vadd.f32 %v642, %v676
    %v693 = vadd.f32 %v643, %v677
    %v694 = vadd.f32 %v644, %v678
    %v695 = vadd.f32 %v645, %v679
    %v696 = vadd.f32 %v646, %v680
    %v697 = vld [vmem:[%s596 + $0x2] sm:$0xff]
    %v698 = vld [vmem:[%s596 + $0xa] sm:$0xff]
    %v699 = vld [vmem:[%s596 + $0x1a] sm:$0xff]
    %v700 = vld [vmem:[%s596 + $0x22] sm:$0xff]
    %v701 = vld [vmem:[%s596 + $0x32] sm:$0xff]
    %v702 = vld [vmem:[%s596 + $0x3a] sm:$0xff]
    %v703 = vld [vmem:[%s596 + $0x4a] sm:$0xff]
    %v704 = vld [vmem:[%s596 + $0x52] sm:$0xff]
    %v705 = vld [vmem:[%s596 + $0x62] sm:$0xff]
    %v706 = vld [vmem:[%s596 + $0x6a] sm:$0xff]
    %v707 = vld [vmem:[%s596 + $0x7a] sm:$0xff]
    %v708 = vld [vmem:[%s596 + $0x82] sm:$0xff]
    %v709 = vld [vmem:[%s596 + $0x92] sm:$0xff]
    %v710 = vld [vmem:[%s596 + $0x9a] sm:$0xff]
    %v711 = vld [vmem:[%s596 + $0xaa] sm:$0xff]
    %v712 = vld [vmem:[%s596 + $0xb2] sm:$0xff]
    %v713 = vld [vmem:[%s3 + $0x2] sm:$0x1]
    %v714 = vperm.slane %v713, 0
    %v715 = vmul.f32 %v697, %v714
    %v716 = vmul.f32 %v698, %v714
    %v717 = vmul.f32 %v699, %v714
    %v718 = vmul.f32 %v700, %v714
    %v719 = vmul.f32 %v701, %v714
    %v720 = vmul.f32 %v702, %v714
    %v721 = vmul.f32 %v703, %v714
    %v722 = vmul.f32 %v704, %v714
    %v723 = vmul.f32 %v705, %v714
    %v724 = vmul.f32 %v706, %v714
    %v725 = vmul.f32 %v707, %v714
    %v726 = vmul.f32 %v708, %v714
    %v727 = vmul.f32 %v709, %v714
    %v728 = vmul.f32 %v710, %v714
    %v729 = vmul.f32 %v711, %v714
    %v730 = vmul.f32 %v712, %v714
    %v731 = vadd.f32 %v681, %v715
    %v732 = vadd.f32 %v682, %v716
    %v733 = vadd.f32 %v683, %v717
    %v734 = vadd.f32 %v684, %v718
    %v735 = vadd.f32 %v685, %v719
    %v736 = vadd.f32 %v686, %v720
    %v737 = vadd.f32 %v687, %v721
    %v738 = vadd.f32 %v688, %v722
    %v739 = vadd.f32 %v689, %v723
    %v740 = vadd.f32 %v690, %v724
    %v741 = vadd.f32 %v691, %v725
    %v742 = vadd.f32 %v692, %v726
    %v743 = vadd.f32 %v693, %v727
    %v744 = vadd.f32 %v694, %v728
    %v745 = vadd.f32 %v695, %v729
    %v746 = vadd.f32 %v696, %v730
    %s747 = sadd.s32 %s594, 1
    %s748 = smul.u32 %s747, 24
    %s749 = scalar_lea.vmem [#allocation2], %s748
    %v750 = vld [vmem:[%s749] sm:$0xff]
    %v751 = vld [vmem:[%s749 + $0x8] sm:$0xff]
    %v752 = vld [vmem:[%s749 + $0x18] sm:$0xff]
    %v753 = vld [vmem:[%s749 + $0x20] sm:$0xff]
    %v754 = vld [vmem:[%s749 + $0x30] sm:$0xff]
    %v755 = vld [vmem:[%s749 + $0x38] sm:$0xff]
    %v756 = vld [vmem:[%s749 + $0x48] sm:$0xff]
    %v757 = vld [vmem:[%s749 + $0x50] sm:$0xff]
    %v758 = vld [vmem:[%s749 + $0x60] sm:$0xff]
    %v759 = vld [vmem:[%s749 + $0x68] sm:$0xff]
    %v760 = vld [vmem:[%s749 + $0x78] sm:$0xff]
    %v761 = vld [vmem:[%s749 + $0x80] sm:$0xff]
    %v762 = vld [vmem:[%s749 + $0x90] sm:$0xff]
    %v763 = vld [vmem:[%s749 + $0x98] sm:$0xff]
    %v764 = vld [vmem:[%s749 + $0xa8] sm:$0xff]
    %v765 = vld [vmem:[%s749 + $0xb0] sm:$0xff]
    %v766 = vld [vmem:[%s3 + $0x3] sm:$0x1]
    %v767 = vperm.slane %v766, 0
    %v768 = vmul.f32 %v750, %v767
    %v769 = vmul.f32 %v751, %v767
    %v770 = vmul.f32 %v752, %v767
    %v771 = vmul.f32 %v753, %v767
    %v772 = vmul.f32 %v754, %v767
    %v773 = vmul.f32 %v755, %v767
    %v774 = vmul.f32 %v756, %v767
    %v775 = vmul.f32 %v757, %v767
    %v776 = vmul.f32 %v758, %v767
    %v777 = vmul.f32 %v759, %v767
    %v778 = vmul.f32 %v760, %v767
    %v779 = vmul.f32 %v761, %v767
    %v780 = vmul.f32 %v762, %v767
    %v781 = vmul.f32 %v763, %v767
    %v782 = vmul.f32 %v764, %v767
    %v783 = vmul.f32 %v765, %v767
    %v784 = vadd.f32 %v731, %v768
    %v785 = vadd.f32 %v732, %v769
    %v786 = vadd.f32 %v733, %v770
    %v787 = vadd.f32 %v734, %v771
    %v788 = vadd.f32 %v735, %v772
    %v789 = vadd.f32 %v736, %v773
    %v790 = vadd.f32 %v737, %v774
    %v791 = vadd.f32 %v738, %v775
    %v792 = vadd.f32 %v739, %v776
    %v793 = vadd.f32 %v740, %v777
    %v794 = vadd.f32 %v741, %v778
    %v795 = vadd.f32 %v742, %v779
    %v796 = vadd.f32 %v743, %v780
    %v797 = vadd.f32 %v744, %v781
    %v798 = vadd.f32 %v745, %v782
    %v799 = vadd.f32 %v746, %v783
    %v800 = vld [vmem:[%s749 + $0x1] sm:$0xff]
    %v801 = vld [vmem:[%s749 + $0x9] sm:$0xff]
    %v802 = vld [vmem:[%s749 + $0x19] sm:$0xff]
    %v803 = vld [vmem:[%s749 + $0x21] sm:$0xff]
    %v804 = vld [vmem:[%s749 + $0x31] sm:$0xff]
    %v805 = vld [vmem:[%s749 + $0x39] sm:$0xff]
    %v806 = vld [vmem:[%s749 + $0x49] sm:$0xff]
    %v807 = vld [vmem:[%s749 + $0x51] sm:$0xff]
    %v808 = vld [vmem:[%s749 + $0x61] sm:$0xff]
    %v809 = vld [vmem:[%s749 + $0x69] sm:$0xff]
    %v810 = vld [vmem:[%s749 + $0x79] sm:$0xff]
    %v811 = vld [vmem:[%s749 + $0x81] sm:$0xff]
    %v812 = vld [vmem:[%s749 + $0x91] sm:$0xff]
    %v813 = vld [vmem:[%s749 + $0x99] sm:$0xff]
    %v814 = vld [vmem:[%s749 + $0xa9] sm:$0xff]
    %v815 = vld [vmem:[%s749 + $0xb1] sm:$0xff]
    %v816 = vld [vmem:[%s3 + $0x4] sm:$0x1]
    %v817 = vperm.slane %v816, 0
    %v818 = vmul.f32 %v800, %v817
    %v819 = vmul.f32 %v801, %v817
    %v820 = vmul.f32 %v802, %v817
    %v821 = vmul.f32 %v803, %v817
    %v822 = vmul.f32 %v804, %v817
    %v823 = vmul.f32 %v805, %v817
    %v824 = vmul.f32 %v806, %v817
    %v825 = vmul.f32 %v807, %v817
    %v826 = vmul.f32 %v808, %v817
    %v827 = vmul.f32 %v809, %v817
    %v828 = vmul.f32 %v810, %v817
    %v829 = vmul.f32 %v811, %v817
    %v830 = vmul.f32 %v812, %v817
    %v831 = vmul.f32 %v813, %v817
    %v832 = vmul.f32 %v814, %v817
    %v833 = vmul.f32 %v815, %v817
    %v834 = vadd.f32 %v784, %v818
    %v835 = vadd.f32 %v785, %v819
    %v836 = vadd.f32 %v786, %v820
    %v837 = vadd.f32 %v787, %v821
    %v838 = vadd.f32 %v788, %v822
    %v839 = vadd.f32 %v789, %v823
    %v840 = vadd.f32 %v790, %v824
    %v841 = vadd.f32 %v791, %v825
    %v842 = vadd.f32 %v792, %v826
    %v843 = vadd.f32 %v793, %v827
    %v844 = vadd.f32 %v794, %v828
    %v845 = vadd.f32 %v795, %v829
    %v846 = vadd.f32 %v796, %v830
    %v847 = vadd.f32 %v797, %v831
    %v848 = vadd.f32 %v798, %v832
    %v849 = vadd.f32 %v799, %v833
    %v850 = vld [vmem:[%s749 + $0x2] sm:$0xff]
    %v851 = vld [vmem:[%s749 + $0xa] sm:$0xff]
    %v852 = vld [vmem:[%s749 + $0x1a] sm:$0xff]
    %v853 = vld [vmem:[%s749 + $0x22] sm:$0xff]
    %v854 = vld [vmem:[%s749 + $0x32] sm:$0xff]
    %v855 = vld [vmem:[%s749 + $0x3a] sm:$0xff]
    %v856 = vld [vmem:[%s749 + $0x4a] sm:$0xff]
    %v857 = vld [vmem:[%s749 + $0x52] sm:$0xff]
    %v858 = vld [vmem:[%s749 + $0x62] sm:$0xff]
    %v859 = vld [vmem:[%s749 + $0x6a] sm:$0xff]
    %v860 = vld [vmem:[%s749 + $0x7a] sm:$0xff]
    %v861 = vld [vmem:[%s749 + $0x82] sm:$0xff]
    %v862 = vld [vmem:[%s749 + $0x92] sm:$0xff]
    %v863 = vld [vmem:[%s749 + $0x9a] sm:$0xff]
    %v864 = vld [vmem:[%s749 + $0xaa] sm:$0xff]
    %v865 = vld [vmem:[%s749 + $0xb2] sm:$0xff]
    %v866 = vld [vmem:[%s3 + $0x5] sm:$0x1]
    %v867 = vperm.slane %v866, 0
    %v868 = vmul.f32 %v850, %v867
    %v869 = vmul.f32 %v851, %v867
    %v870 = vmul.f32 %v852, %v867
    %v871 = vmul.f32 %v853, %v867
    %v872 = vmul.f32 %v854, %v867
    %v873 = vmul.f32 %v855, %v867
    %v874 = vmul.f32 %v856, %v867
    %v875 = vmul.f32 %v857, %v867
    %v876 = vmul.f32 %v858, %v867
    %v877 = vmul.f32 %v859, %v867
    %v878 = vmul.f32 %v860, %v867
    %v879 = vmul.f32 %v861, %v867
    %v880 = vmul.f32 %v862, %v867
    %v881 = vmul.f32 %v863, %v867
    %v882 = vmul.f32 %v864, %v867
    %v883 = vmul.f32 %v865, %v867
    %v884 = vadd.f32 %v834, %v868
    %v885 = vadd.f32 %v835, %v869
    %v886 = vadd.f32 %v836, %v870
    %v887 = vadd.f32 %v837, %v871
    %v888 = vadd.f32 %v838, %v872
    %v889 = vadd.f32 %v839, %v873
    %v890 = vadd.f32 %v840, %v874
    %v891 = vadd.f32 %v841, %v875
    %v892 = vadd.f32 %v842, %v876
    %v893 = vadd.f32 %v843, %v877
    %v894 = vadd.f32 %v844, %v878
    %v895 = vadd.f32 %v845, %v879
    %v896 = vadd.f32 %v846, %v880
    %v897 = vadd.f32 %v847, %v881
    %v898 = vadd.f32 %v848, %v882
    %v899 = vadd.f32 %v849, %v883
    %s900 = sadd.s32 %s594, 2
    %s901 = smul.u32 %s900, 24
    %s902 = scalar_lea.vmem [#allocation2], %s901
    %v903 = vld [vmem:[%s902] sm:$0xff]
    %v904 = vld [vmem:[%s902 + $0x8] sm:$0xff]
    %v905 = vld [vmem:[%s902 + $0x18] sm:$0xff]
    %v906 = vld [vmem:[%s902 + $0x20] sm:$0xff]
    %v907 = vld [vmem:[%s902 + $0x30] sm:$0xff]
    %v908 = vld [vmem:[%s902 + $0x38] sm:$0xff]
    %v909 = vld [vmem:[%s902 + $0x48] sm:$0xff]
    %v910 = vld [vmem:[%s902 + $0x50] sm:$0xff]
    %v911 = vld [vmem:[%s902 + $0x60] sm:$0xff]
    %v912 = vld [vmem:[%s902 + $0x68] sm:$0xff]
    %v913 = vld [vmem:[%s902 + $0x78] sm:$0xff]
    %v914 = vld [vmem:[%s902 + $0x80] sm:$0xff]
    %v915 = vld [vmem:[%s902 + $0x90] sm:$0xff]
    %v916 = vld [vmem:[%s902 + $0x98] sm:$0xff]
    %v917 = vld [vmem:[%s902 + $0xa8] sm:$0xff]
    %v918 = vld [vmem:[%s902 + $0xb0] sm:$0xff]
    %v919 = vld [vmem:[%s3 + $0x6] sm:$0x1]
    %v920 = vperm.slane %v919, 0
    %v921 = vmul.f32 %v903, %v920
    %v922 = vmul.f32 %v904, %v920
    %v923 = vmul.f32 %v905, %v920
    %v924 = vmul.f32 %v906, %v920
    %v925 = vmul.f32 %v907, %v920
    %v926 = vmul.f32 %v908, %v920
    %v927 = vmul.f32 %v909, %v920
    %v928 = vmul.f32 %v910, %v920
    %v929 = vmul.f32 %v911, %v920
    %v930 = vmul.f32 %v912, %v920
    %v931 = vmul.f32 %v913, %v920
    %v932 = vmul.f32 %v914, %v920
    %v933 = vmul.f32 %v915, %v920
    %v934 = vmul.f32 %v916, %v920
    %v935 = vmul.f32 %v917, %v920
    %v936 = vmul.f32 %v918, %v920
    %v937 = vadd.f32 %v884, %v921
    %v938 = vadd.f32 %v885, %v922
    %v939 = vadd.f32 %v886, %v923
    %v940 = vadd.f32 %v887, %v924
    %v941 = vadd.f32 %v888, %v925
    %v942 = vadd.f32 %v889, %v926
    %v943 = vadd.f32 %v890, %v927
    %v944 = vadd.f32 %v891, %v928
    %v945 = vadd.f32 %v892, %v929
    %v946 = vadd.f32 %v893, %v930
    %v947 = vadd.f32 %v894, %v931
    %v948 = vadd.f32 %v895, %v932
    %v949 = vadd.f32 %v896, %v933
    %v950 = vadd.f32 %v897, %v934
    %v951 = vadd.f32 %v898, %v935
    %v952 = vadd.f32 %v899, %v936
    %v953 = vld [vmem:[%s902 + $0x1] sm:$0xff]
    %v954 = vld [vmem:[%s902 + $0x9] sm:$0xff]
    %v955 = vld [vmem:[%s902 + $0x19] sm:$0xff]
    %v956 = vld [vmem:[%s902 + $0x21] sm:$0xff]
    %v957 = vld [vmem:[%s902 + $0x31] sm:$0xff]
    %v958 = vld [vmem:[%s902 + $0x39] sm:$0xff]
    %v959 = vld [vmem:[%s902 + $0x49] sm:$0xff]
    %v960 = vld [vmem:[%s902 + $0x51] sm:$0xff]
    %v961 = vld [vmem:[%s902 + $0x61] sm:$0xff]
    %v962 = vld [vmem:[%s902 + $0x69] sm:$0xff]
    %v963 = vld [vmem:[%s902 + $0x79] sm:$0xff]
    %v964 = vld [vmem:[%s902 + $0x81] sm:$0xff]
    %v965 = vld [vmem:[%s902 + $0x91] sm:$0xff]
    %v966 = vld [vmem:[%s902 + $0x99] sm:$0xff]
    %v967 = vld [vmem:[%s902 + $0xa9] sm:$0xff]
    %v968 = vld [vmem:[%s902 + $0xb1] sm:$0xff]
    %v969 = vld [vmem:[%s3 + $0x7] sm:$0x1]
    %v970 = vperm.slane %v969, 0
    %v971 = vmul.f32 %v953, %v970
    %v972 = vmul.f32 %v954, %v970
    %v973 = vmul.f32 %v955, %v970
    %v974 = vmul.f32 %v956, %v970
    %v975 = vmul.f32 %v957, %v970
    %v976 = vmul.f32 %v958, %v970
    %v977 = vmul.f32 %v959, %v970
    %v978 = vmul.f32 %v960, %v970
    %v979 = vmul.f32 %v961, %v970
    %v980 = vmul.f32 %v962, %v970
    %v981 = vmul.f32 %v963, %v970
    %v982 = vmul.f32 %v964, %v970
    %v983 = vmul.f32 %v965, %v970
    %v984 = vmul.f32 %v966, %v970
    %v985 = vmul.f32 %v967, %v970
    %v986 = vmul.f32 %v968, %v970
    %v987 = vadd.f32 %v937, %v971
    %v988 = vadd.f32 %v938, %v972
    %v989 = vadd.f32 %v939, %v973
    %v990 = vadd.f32 %v940, %v974
    %v991 = vadd.f32 %v941, %v975
    %v992 = vadd.f32 %v942, %v976
    %v993 = vadd.f32 %v943, %v977
    %v994 = vadd.f32 %v944, %v978
    %v995 = vadd.f32 %v945, %v979
    %v996 = vadd.f32 %v946, %v980
    %v997 = vadd.f32 %v947, %v981
    %v998 = vadd.f32 %v948, %v982
    %v999 = vadd.f32 %v949, %v983
    %v1000 = vadd.f32 %v950, %v984
    %v1001 = vadd.f32 %v951, %v985
    %v1002 = vadd.f32 %v952, %v986
    %v1003 = vld [vmem:[%s902 + $0x2] sm:$0xff]
    %v1004 = vld [vmem:[%s902 + $0xa] sm:$0xff]
    %v1005 = vld [vmem:[%s902 + $0x1a] sm:$0xff]
    %v1006 = vld [vmem:[%s902 + $0x22] sm:$0xff]
    %v1007 = vld [vmem:[%s902 + $0x32] sm:$0xff]
    %v1008 = vld [vmem:[%s902 + $0x3a] sm:$0xff]
    %v1009 = vld [vmem:[%s902 + $0x4a] sm:$0xff]
    %v1010 = vld [vmem:[%s902 + $0x52] sm:$0xff]
    %v1011 = vld [vmem:[%s902 + $0x62] sm:$0xff]
    %v1012 = vld [vmem:[%s902 + $0x6a] sm:$0xff]
    %v1013 = vld [vmem:[%s902 + $0x7a] sm:$0xff]
    %v1014 = vld [vmem:[%s902 + $0x82] sm:$0xff]
    %v1015 = vld [vmem:[%s902 + $0x92] sm:$0xff]
    %v1016 = vld [vmem:[%s902 + $0x9a] sm:$0xff]
    %v1017 = vld [vmem:[%s902 + $0xaa] sm:$0xff]
    %v1018 = vld [vmem:[%s902 + $0xb2] sm:$0xff]
    %v1019 = vld [vmem:[%s3 + $0x8] sm:$0x1]
    %v1020 = vperm.slane %v1019, 0
    %v1021 = vmul.f32 %v1003, %v1020
    %v1022 = vmul.f32 %v1004, %v1020
    %v1023 = vmul.f32 %v1005, %v1020
    %v1024 = vmul.f32 %v1006, %v1020
    %v1025 = vmul.f32 %v1007, %v1020
    %v1026 = vmul.f32 %v1008, %v1020
    %v1027 = vmul.f32 %v1009, %v1020
    %v1028 = vmul.f32 %v1010, %v1020
    %v1029 = vmul.f32 %v1011, %v1020
    %v1030 = vmul.f32 %v1012, %v1020
    %v1031 = vmul.f32 %v1013, %v1020
    %v1032 = vmul.f32 %v1014, %v1020
    %v1033 = vmul.f32 %v1015, %v1020
    %v1034 = vmul.f32 %v1016, %v1020
    %v1035 = vmul.f32 %v1017, %v1020
    %v1036 = vmul.f32 %v1018, %v1020
    %v1037 = vadd.f32 %v987, %v1021
    %v1038 = vadd.f32 %v988, %v1022
    %v1039 = vadd.f32 %v989, %v1023
    %v1040 = vadd.f32 %v990, %v1024
    %v1041 = vadd.f32 %v991, %v1025
    %v1042 = vadd.f32 %v992, %v1026
    %v1043 = vadd.f32 %v993, %v1027
    %v1044 = vadd.f32 %v994, %v1028
    %v1045 = vadd.f32 %v995, %v1029
    %v1046 = vadd.f32 %v996, %v1030
    %v1047 = vadd.f32 %v997, %v1031
    %v1048 = vadd.f32 %v998, %v1032
    %v1049 = vadd.f32 %v999, %v1033
    %v1050 = vadd.f32 %v1000, %v1034
    %v1051 = vadd.f32 %v1001, %v1035
    %v1052 = vadd.f32 %v1002, %v1036
    %v1054 = vperm.slane %v586, 0
    %v1056 = vadd.f32 %v1037, %v1054
    %v1057 = vadd.f32 %v1038, %v1054
    %v1058 = vadd.f32 %v1039, %v1054
    %v1059 = vadd.f32 %v1040, %v1054
    %v1060 = vadd.f32 %v1041, %v1054
    %v1061 = vadd.f32 %v1042, %v1054
    %v1062 = vadd.f32 %v1043, %v1054
    %v1063 = vadd.f32 %v1044, %v1054
    %v1064 = vadd.f32 %v1045, %v1054
    %v1065 = vadd.f32 %v1046, %v1054
    %v1066 = vadd.f32 %v1047, %v1054
    %v1067 = vadd.f32 %v1048, %v1054
    %v1068 = vadd.f32 %v1049, %v1054
    %v1069 = vadd.f32 %v1050, %v1054
    %v1070 = vadd.f32 %v1051, %v1054
    %v1071 = vadd.f32 %v1052, %v1054
    %v1072 = vxor.u32 %v1056, 2147483648
    %v1073 = vxor.u32 %v1057, 2147483648
    %v1074 = vxor.u32 %v1058, 2147483648
    %v1075 = vxor.u32 %v1059, 2147483648
    %v1076 = vxor.u32 %v1060, 2147483648
    %v1077 = vxor.u32 %v1061, 2147483648
    %v1078 = vxor.u32 %v1062, 2147483648
    %v1079 = vxor.u32 %v1063, 2147483648
    %v1080 = vxor.u32 %v1064, 2147483648
    %v1081 = vxor.u32 %v1065, 2147483648
    %v1082 = vxor.u32 %v1066, 2147483648
    %v1083 = vxor.u32 %v1067, 2147483648
    %v1084 = vxor.u32 %v1068, 2147483648
    %v1085 = vxor.u32 %v1069, 2147483648
    %v1086 = vxor.u32 %v1070, 2147483648
    %v1087 = vxor.u32 %v1071, 2147483648
    %v1088 = vmul.f32 %v1072, 1.442695
    %v1089 = vpow.pop %v1088
    %v1090 = vmul.f32 %v1073, 1.442695
    %v1091 = vpow.pop %v1090
    %v1092 = vmul.f32 %v1074, 1.442695
    %v1093 = vpow.pop %v1092
    %v1094 = vmul.f32 %v1075, 1.442695
    %v1095 = vpow.pop %v1094
    %v1096 = vmul.f32 %v1076, 1.442695
    %v1097 = vpow.pop %v1096
    %v1098 = vmul.f32 %v1077, 1.442695
    %v1099 = vpow.pop %v1098
    %v1100 = vmul.f32 %v1078, 1.442695
    %v1101 = vpow.pop %v1100
    %v1102 = vmul.f32 %v1079, 1.442695
    %v1103 = vpow.pop %v1102
    %v1104 = vmul.f32 %v1080, 1.442695
    %v1105 = vpow.pop %v1104
    %v1106 = vmul.f32 %v1081, 1.442695
    %v1107 = vpow.pop %v1106
    %v1108 = vmul.f32 %v1082, 1.442695
    %v1109 = vpow.pop %v1108
    %v1110 = vmul.f32 %v1083, 1.442695
    %v1111 = vpow.pop %v1110
    %v1112 = vmul.f32 %v1084, 1.442695
    %v1113 = vpow.pop %v1112
    %v1114 = vmul.f32 %v1085, 1.442695
    %v1115 = vpow.pop %v1114
    %v1116 = vmul.f32 %v1086, 1.442695
    %v1117 = vpow.pop %v1116
    %v1118 = vmul.f32 %v1087, 1.442695
    %v1119 = vpow.pop %v1118
    %v1120 = vadd.f32 %v1089, 1.0
    %v1121 = vadd.f32 %v1091, 1.0
    %v1122 = vadd.f32 %v1093, 1.0
    %v1123 = vadd.f32 %v1095, 1.0
    %v1124 = vadd.f32 %v1097, 1.0
    %v1125 = vadd.f32 %v1099, 1.0
    %v1126 = vadd.f32 %v1101, 1.0
    %v1127 = vadd.f32 %v1103, 1.0
    %v1128 = vadd.f32 %v1105, 1.0
    %v1129 = vadd.f32 %v1107, 1.0
    %v1130 = vadd.f32 %v1109, 1.0
    %v1131 = vadd.f32 %v1111, 1.0
    %v1132 = vadd.f32 %v1113, 1.0
    %v1133 = vadd.f32 %v1115, 1.0
    %v1134 = vadd.f32 %v1117, 1.0
    %v1135 = vadd.f32 %v1119, 1.0
    %v1136 = vrcp.pop %v1120
    %v1137 = vmul.f32 %v1120, %v1136
    %v1138 = vsub.f32 1.0, %v1137
    %v1139 = vmul.f32 %v1136, %v1138
    %v1140 = vadd.f32 %v1136, %v1139
    %vm1141 = vweird.f32 %v1120
    %vm1142 = vweird.f32 %v1136
    %vm1143 = vmor %vm1141, %vm1142
    %v1144 = vsel %vm1143, %v1136, %v1140
    %v1145 = vand.u32 2147483647, %v1120
    %vm1146 = vcmp.eq.f32.partialorder %v1145, 8.507059e+37
    %v1147 = vand.u32 %v1120, 2147483648
    %v1148 = vor.u32 1.1754944e-38, %v1147
    %v1149 = vsel %vm1146, %v1148, %v1144
    %v1150 = vmul.f32 1.0, %v1149
    %v1151 = vrcp.pop %v1121
    %v1152 = vmul.f32 %v1121, %v1151
    %v1153 = vsub.f32 1.0, %v1152
    %v1154 = vmul.f32 %v1151, %v1153
    %v1155 = vadd.f32 %v1151, %v1154
    %vm1156 = vweird.f32 %v1121
    %vm1157 = vweird.f32 %v1151
    %vm1158 = vmor %vm1156, %vm1157
    %v1159 = vsel %vm1158, %v1151, %v1155
    %v1160 = vand.u32 2147483647, %v1121
    %vm1161 = vcmp.eq.f32.partialorder %v1160, 8.507059e+37
    %v1162 = vand.u32 %v1121, 2147483648
    %v1163 = vor.u32 1.1754944e-38, %v1162
    %v1164 = vsel %vm1161, %v1163, %v1159
    %v1165 = vmul.f32 1.0, %v1164
    %v1166 = vrcp.pop %v1122
    %v1167 = vmul.f32 %v1122, %v1166
    %v1168 = vsub.f32 1.0, %v1167
    %v1169 = vmul.f32 %v1166, %v1168
    %v1170 = vadd.f32 %v1166, %v1169
    %vm1171 = vweird.f32 %v1122
    %vm1172 = vweird.f32 %v1166
    %vm1173 = vmor %vm1171, %vm1172
    %v1174 = vsel %vm1173, %v1166, %v1170
    %v1175 = vand.u32 2147483647, %v1122
    %vm1176 = vcmp.eq.f32.partialorder %v1175, 8.507059e+37
    %v1177 = vand.u32 %v1122, 2147483648
    %v1178 = vor.u32 1.1754944e-38, %v1177
    %v1179 = vsel %vm1176, %v1178, %v1174
    %v1180 = vmul.f32 1.0, %v1179
    %v1181 = vrcp.pop %v1123
    %v1182 = vmul.f32 %v1123, %v1181
    %v1183 = vsub.f32 1.0, %v1182
    %v1184 = vmul.f32 %v1181, %v1183
    %v1185 = vadd.f32 %v1181, %v1184
    %vm1186 = vweird.f32 %v1123
    %vm1187 = vweird.f32 %v1181
    %vm1188 = vmor %vm1186, %vm1187
    %v1189 = vsel %vm1188, %v1181, %v1185
    %v1190 = vand.u32 2147483647, %v1123
    %vm1191 = vcmp.eq.f32.partialorder %v1190, 8.507059e+37
    %v1192 = vand.u32 %v1123, 2147483648
    %v1193 = vor.u32 1.1754944e-38, %v1192
    %v1194 = vsel %vm1191, %v1193, %v1189
    %v1195 = vmul.f32 1.0, %v1194
    %v1196 = vrcp.pop %v1124
    %v1197 = vmul.f32 %v1124, %v1196
    %v1198 = vsub.f32 1.0, %v1197
    %v1199 = vmul.f32 %v1196, %v1198
    %v1200 = vadd.f32 %v1196, %v1199
    %vm1201 = vweird.f32 %v1124
    %vm1202 = vweird.f32 %v1196
    %vm1203 = vmor %vm1201, %vm1202
    %v1204 = vsel %vm1203, %v1196, %v1200
    %v1205 = vand.u32 2147483647, %v1124
    %vm1206 = vcmp.eq.f32.partialorder %v1205, 8.507059e+37
    %v1207 = vand.u32 %v1124, 2147483648
    %v1208 = vor.u32 1.1754944e-38, %v1207
    %v1209 = vsel %vm1206, %v1208, %v1204
    %v1210 = vmul.f32 1.0, %v1209
    %v1211 = vrcp.pop %v1125
    %v1212 = vmul.f32 %v1125, %v1211
    %v1213 = vsub.f32 1.0, %v1212
    %v1214 = vmul.f32 %v1211, %v1213
    %v1215 = vadd.f32 %v1211, %v1214
    %vm1216 = vweird.f32 %v1125
    %vm1217 = vweird.f32 %v1211
    %vm1218 = vmor %vm1216, %vm1217
    %v1219 = vsel %vm1218, %v1211, %v1215
    %v1220 = vand.u32 2147483647, %v1125
    %vm1221 = vcmp.eq.f32.partialorder %v1220, 8.507059e+37
    %v1222 = vand.u32 %v1125, 2147483648
    %v1223 = vor.u32 1.1754944e-38, %v1222
    %v1224 = vsel %vm1221, %v1223, %v1219
    %v1225 = vmul.f32 1.0, %v1224
    %v1226 = vrcp.pop %v1126
    %v1227 = vmul.f32 %v1126, %v1226
    %v1228 = vsub.f32 1.0, %v1227
    %v1229 = vmul.f32 %v1226, %v1228
    %v1230 = vadd.f32 %v1226, %v1229
    %vm1231 = vweird.f32 %v1126
    %vm1232 = vweird.f32 %v1226
    %vm1233 = vmor %vm1231, %vm1232
    %v1234 = vsel %vm1233, %v1226, %v1230
    %v1235 = vand.u32 2147483647, %v1126
    %vm1236 = vcmp.eq.f32.partialorder %v1235, 8.507059e+37
    %v1237 = vand.u32 %v1126, 2147483648
    %v1238 = vor.u32 1.1754944e-38, %v1237
    %v1239 = vsel %vm1236, %v1238, %v1234
    %v1240 = vmul.f32 1.0, %v1239
    %v1241 = vrcp.pop %v1127
    %v1242 = vmul.f32 %v1127, %v1241
    %v1243 = vsub.f32 1.0, %v1242
    %v1244 = vmul.f32 %v1241, %v1243
    %v1245 = vadd.f32 %v1241, %v1244
    %vm1246 = vweird.f32 %v1127
    %vm1247 = vweird.f32 %v1241
    %vm1248 = vmor %vm1246, %vm1247
    %v1249 = vsel %vm1248, %v1241, %v1245
    %v1250 = vand.u32 2147483647, %v1127
    %vm1251 = vcmp.eq.f32.partialorder %v1250, 8.507059e+37
    %v1252 = vand.u32 %v1127, 2147483648
    %v1253 = vor.u32 1.1754944e-38, %v1252
    %v1254 = vsel %vm1251, %v1253, %v1249
    %v1255 = vmul.f32 1.0, %v1254
    %v1256 = vrcp.pop %v1128
    %v1257 = vmul.f32 %v1128, %v1256
    %v1258 = vsub.f32 1.0, %v1257
    %v1259 = vmul.f32 %v1256, %v1258
    %v1260 = vadd.f32 %v1256, %v1259
    %vm1261 = vweird.f32 %v1128
    %vm1262 = vweird.f32 %v1256
    %vm1263 = vmor %vm1261, %vm1262
    %v1264 = vsel %vm1263, %v1256, %v1260
    %v1265 = vand.u32 2147483647, %v1128
    %vm1266 = vcmp.eq.f32.partialorder %v1265, 8.507059e+37
    %v1267 = vand.u32 %v1128, 2147483648
    %v1268 = vor.u32 1.1754944e-38, %v1267
    %v1269 = vsel %vm1266, %v1268, %v1264
    %v1270 = vmul.f32 1.0, %v1269
    %v1271 = vrcp.pop %v1129
    %v1272 = vmul.f32 %v1129, %v1271
    %v1273 = vsub.f32 1.0, %v1272
    %v1274 = vmul.f32 %v1271, %v1273
    %v1275 = vadd.f32 %v1271, %v1274
    %vm1276 = vweird.f32 %v1129
    %vm1277 = vweird.f32 %v1271
    %vm1278 = vmor %vm1276, %vm1277
    %v1279 = vsel %vm1278, %v1271, %v1275
    %v1280 = vand.u32 2147483647, %v1129
    %vm1281 = vcmp.eq.f32.partialorder %v1280, 8.507059e+37
    %v1282 = vand.u32 %v1129, 2147483648
    %v1283 = vor.u32 1.1754944e-38, %v1282
    %v1284 = vsel %vm1281, %v1283, %v1279
    %v1285 = vmul.f32 1.0, %v1284
    %v1286 = vrcp.pop %v1130
    %v1287 = vmul.f32 %v1130, %v1286
    %v1288 = vsub.f32 1.0, %v1287
    %v1289 = vmul.f32 %v1286, %v1288
    %v1290 = vadd.f32 %v1286, %v1289
    %vm1291 = vweird.f32 %v1130
    %vm1292 = vweird.f32 %v1286
    %vm1293 = vmor %vm1291, %vm1292
    %v1294 = vsel %vm1293, %v1286, %v1290
    %v1295 = vand.u32 2147483647, %v1130
    %vm1296 = vcmp.eq.f32.partialorder %v1295, 8.507059e+37
    %v1297 = vand.u32 %v1130, 2147483648
    %v1298 = vor.u32 1.1754944e-38, %v1297
    %v1299 = vsel %vm1296, %v1298, %v1294
    %v1300 = vmul.f32 1.0, %v1299
    %v1301 = vrcp.pop %v1131
    %v1302 = vmul.f32 %v1131, %v1301
    %v1303 = vsub.f32 1.0, %v1302
    %v1304 = vmul.f32 %v1301, %v1303
    %v1305 = vadd.f32 %v1301, %v1304
    %vm1306 = vweird.f32 %v1131
    %vm1307 = vweird.f32 %v1301
    %vm1308 = vmor %vm1306, %vm1307
    %v1309 = vsel %vm1308, %v1301, %v1305
    %v1310 = vand.u32 2147483647, %v1131
    %vm1311 = vcmp.eq.f32.partialorder %v1310, 8.507059e+37
    %v1312 = vand.u32 %v1131, 2147483648
    %v1313 = vor.u32 1.1754944e-38, %v1312
    %v1314 = vsel %vm1311, %v1313, %v1309
    %v1315 = vmul.f32 1.0, %v1314
    %v1316 = vrcp.pop %v1132
    %v1317 = vmul.f32 %v1132, %v1316
    %v1318 = vsub.f32 1.0, %v1317
    %v1319 = vmul.f32 %v1316, %v1318
    %v1320 = vadd.f32 %v1316, %v1319
    %vm1321 = vweird.f32 %v1132
    %vm1322 = vweird.f32 %v1316
    %vm1323 = vmor %vm1321, %vm1322
    %v1324 = vsel %vm1323, %v1316, %v1320
    %v1325 = vand.u32 2147483647, %v1132
    %vm1326 = vcmp.eq.f32.partialorder %v1325, 8.507059e+37
    %v1327 = vand.u32 %v1132, 2147483648
    %v1328 = vor.u32 1.1754944e-38, %v1327
    %v1329 = vsel %vm1326, %v1328, %v1324
    %v1330 = vmul.f32 1.0, %v1329
    %v1331 = vrcp.pop %v1133
    %v1332 = vmul.f32 %v1133, %v1331
    %v1333 = vsub.f32 1.0, %v1332
    %v1334 = vmul.f32 %v1331, %v1333
    %v1335 = vadd.f32 %v1331, %v1334
    %vm1336 = vweird.f32 %v1133
    %vm1337 = vweird.f32 %v1331
    %vm1338 = vmor %vm1336, %vm1337
    %v1339 = vsel %vm1338, %v1331, %v1335
    %v1340 = vand.u32 2147483647, %v1133
    %vm1341 = vcmp.eq.f32.partialorder %v1340, 8.507059e+37
    %v1342 = vand.u32 %v1133, 2147483648
    %v1343 = vor.u32 1.1754944e-38, %v1342
    %v1344 = vsel %vm1341, %v1343, %v1339
    %v1345 = vmul.f32 1.0, %v1344
    %v1346 = vrcp.pop %v1134
    %v1347 = vmul.f32 %v1134, %v1346
    %v1348 = vsub.f32 1.0, %v1347
    %v1349 = vmul.f32 %v1346, %v1348
    %v1350 = vadd.f32 %v1346, %v1349
    %vm1351 = vweird.f32 %v1134
    %vm1352 = vweird.f32 %v1346
    %vm1353 = vmor %vm1351, %vm1352
    %v1354 = vsel %vm1353, %v1346, %v1350
    %v1355 = vand.u32 2147483647, %v1134
    %vm1356 = vcmp.eq.f32.partialorder %v1355, 8.507059e+37
    %v1357 = vand.u32 %v1134, 2147483648
    %v1358 = vor.u32 1.1754944e-38, %v1357
    %v1359 = vsel %vm1356, %v1358, %v1354
    %v1360 = vmul.f32 1.0, %v1359
    %v1361 = vrcp.pop %v1135
    %v1362 = vmul.f32 %v1135, %v1361
    %v1363 = vsub.f32 1.0, %v1362
    %v1364 = vmul.f32 %v1361, %v1363
    %v1365 = vadd.f32 %v1361, %v1364
    %vm1366 = vweird.f32 %v1135
    %vm1367 = vweird.f32 %v1361
    %vm1368 = vmor %vm1366, %vm1367
    %v1369 = vsel %vm1368, %v1361, %v1365
    %v1370 = vand.u32 2147483647, %v1135
    %vm1371 = vcmp.eq.f32.partialorder %v1370, 8.507059e+37
    %v1372 = vand.u32 %v1135, 2147483648
    %v1373 = vor.u32 1.1754944e-38, %v1372
    %v1374 = vsel %vm1371, %v1373, %v1369
    %v1375 = vmul.f32 1.0, %v1374
    %v1376 = vmul.f32 %v1056, %v1150
    %v1377 = vmul.f32 %v1057, %v1165
    %v1378 = vmul.f32 %v1058, %v1180
    %v1379 = vmul.f32 %v1059, %v1195
    %v1380 = vmul.f32 %v1060, %v1210
    %v1381 = vmul.f32 %v1061, %v1225
    %v1382 = vmul.f32 %v1062, %v1240
    %v1383 = vmul.f32 %v1063, %v1255
    %v1384 = vmul.f32 %v1064, %v1270
    %v1385 = vmul.f32 %v1065, %v1285
    %v1386 = vmul.f32 %v1066, %v1300
    %v1387 = vmul.f32 %v1067, %v1315
    %v1388 = vmul.f32 %v1068, %v1330
    %v1389 = vmul.f32 %v1069, %v1345
    %v1390 = vmul.f32 %v1070, %v1360
    %v1391 = vmul.f32 %v1071, %v1375
    %s1392 = smul.u32 %s594, 16
    %s1393 = scalar_lea.vmem [#allocation3], %s1392
    %1394 = vst.msk [vmem:[%s1393] sm:$0xff] %vm38, %v1376
    %1395 = vst.msk [vmem:[%s1393 + $0x8] sm:$0xff] %vm38, %v1377
    %1396 = vst.msk [vmem:[%s1393 + $0x10] sm:$0xff] %vm38, %v1378
    %1397 = vst.msk [vmem:[%s1393 + $0x18] sm:$0xff] %vm38, %v1379
    %1398 = vst.msk [vmem:[%s1393 + $0x20] sm:$0xff] %vm38, %v1380
    %1399 = vst.msk [vmem:[%s1393 + $0x28] sm:$0xff] %vm38, %v1381
    %1400 = vst.msk [vmem:[%s1393 + $0x30] sm:$0xff] %vm38, %v1382
    %1401 = vst.msk [vmem:[%s1393 + $0x38] sm:$0xff] %vm38, %v1383
    %1402 = vst.msk [vmem:[%s1393 + $0x40] sm:$0xff] %vm38, %v1384
    %1403 = vst.msk [vmem:[%s1393 + $0x48] sm:$0xff] %vm38, %v1385
    %1404 = vst.msk [vmem:[%s1393 + $0x50] sm:$0xff] %vm38, %v1386
    %1405 = vst.msk [vmem:[%s1393 + $0x58] sm:$0xff] %vm38, %v1387
    %1406 = vst.msk [vmem:[%s1393 + $0x60] sm:$0xff] %vm38, %v1388
    %1407 = vst.msk [vmem:[%s1393 + $0x68] sm:$0xff] %vm38, %v1389
    %1408 = vst.msk [vmem:[%s1393 + $0x70] sm:$0xff] %vm38, %v1390
    %1409 = vst.msk [vmem:[%s1393 + $0x78] sm:$0xff] %vm38, %v1391
    %v1410 = vsel %vm38, %v1376, 0.0
    %v1411 = vsel %vm38, %v1377, 0.0
    %v1412 = vadd.f32 %v1410, %v1411
    %v1413 = vsel %vm38, %v1378, 0.0
    %v1414 = vadd.f32 %v1412, %v1413
    %v1415 = vsel %vm38, %v1379, 0.0
    %v1416 = vadd.f32 %v1414, %v1415
    %v1417 = vsel %vm38, %v1380, 0.0
    %v1418 = vadd.f32 %v1416, %v1417
    %v1419 = vsel %vm38, %v1381, 0.0
    %v1420 = vadd.f32 %v1418, %v1419
    %v1421 = vsel %vm38, %v1382, 0.0
    %v1422 = vadd.f32 %v1420, %v1421
    %v1423 = vsel %vm38, %v1383, 0.0
    %v1424 = vadd.f32 %v1422, %v1423
    %v1425 = vsel %vm38, %v1384, 0.0
    %v1426 = vadd.f32 %v1424, %v1425
    %v1427 = vsel %vm38, %v1385, 0.0
    %v1428 = vadd.f32 %v1426, %v1427
    %v1429 = vsel %vm38, %v1386, 0.0
    %v1430 = vadd.f32 %v1428, %v1429
    %v1431 = vsel %vm38, %v1387, 0.0
    %v1432 = vadd.f32 %v1430, %v1431
    %v1433 = vsel %vm38, %v1388, 0.0
    %v1434 = vadd.f32 %v1432, %v1433
    %v1435 = vsel %vm38, %v1389, 0.0
    %v1436 = vadd.f32 %v1434, %v1435
    %v1437 = vsel %vm38, %v1390, 0.0
    %v1438 = vadd.f32 %v1436, %v1437
    %v1439 = vsel %vm38, %v1391, 0.0
    %v1440 = vadd.f32 %v1438, %v1439
    %v1441 = vrot.slane %v1440, 4
    %v1442 = vadd.f32 %v1440, %v1441
    %v1443 = vrot.slane %v1442, 2
    %v1444 = vadd.f32 %v1442, %v1443
    %v1445 = vrot.slane %v1444, 1
    %v1446 = vadd.f32 %v1444, %v1445
    %v1447 = vadd.f32 %v593, %v1446
  $region57: #{mbconv_forward.1} parent=0 // loop_footer
    %s592 = sadd.s32 1, %s588
  $region58: #{mbconv_forward.1} parent=0 // loop_footer_branch
    %587 = sbr.rel target = $region54
  $region59: #{mbconv_forward.1} parent=0 // loop_exit
    _
  %v1448 = vmul.f32 %v593, 0.00390625
  %v1449 = vld [vmem:[%s5] sm:$0xff]
  %v1450 = vld [vmem:[%s5 + $0x8] sm:$0xff]
  %v1451 = vld [vmem:[%s5 + $0x10] sm:$0xff]
  %v1452 = vld [vmem:[%s5 + $0x18] sm:$0xff]
  %v1453 = vld [vmem:[%s5 + $0x20] sm:$0xff]
  %v1454 = vld [vmem:[%s5 + $0x28] sm:$0xff]
  %v1455 = vld [vmem:[%s5 + $0x30] sm:$0xff]
  %v1456 = vld [vmem:[%s5 + $0x38] sm:$0xff]
  %v1457 = vld [vmem:[%s6] sm:$0x1]
  %v1459 = vsel %vm38, %v1448, 0
  %1461 = vmatpush.msra.mxu0 0.0
  %1462 = vmatpush.msra.mxu0 0.0
  %1463 = vmatpush.msra.mxu0 0.0
  %1464 = vmatpush.msra.mxu0 0.0
  %1465 = vmatpush.msra.mxu0 0.0
  %1466 = vmatpush.msra.mxu0 0.0
  %1467 = vmatpush.msra.mxu0 0.0
  %1468 = vmatpush.msra.mxu0 0.0
  %1469 = vmatpush.msra.mxu0 %v1456
  %1470 = vmatpush.msra.mxu0 %v1455
  %1471 = vmatpush.msra.mxu0 %v1454
  %1472 = vmatpush.msra.mxu0 %v1453
  %1473 = vmatpush.msra.mxu0 %v1452
  %1474 = vmatpush.msra.mxu0 %v1451
  %1475 = vmatpush.msra.mxu0 %v1450
  %1476 = vmatpush.msra.mxu0 %v1449
  %1477 = vmatmul.f32.gmra.mxu0 %v1459
  %v1478 = vpop.f32.mrf.mxu0
  %v1479 = vadd.f32 %v1457, %v1478
  %1480 = vdwg.mxu0
  %v1481 = vxor.u32 %v1479, 2147483648
  %v1482 = vmul.f32 %v1481, 1.442695
  %v1483 = vpow.pop %v1482
  %v1484 = vadd.f32 %v1483, 1.0
  %v1485 = vrcp.pop %v1484
  %v1486 = vmul.f32 %v1484, %v1485
  %v1487 = vsub.f32 1.0, %v1486
  %v1488 = vmul.f32 %v1485, %v1487
  %v1489 = vadd.f32 %v1485, %v1488
  %vm1490 = vweird.f32 %v1484
  %vm1491 = vweird.f32 %v1485
  %vm1492 = vmor %vm1490, %vm1491
  %v1493 = vsel %vm1492, %v1485, %v1489
  %v1494 = vand.u32 2147483647, %v1484
  %vm1495 = vcmp.eq.f32.partialorder %v1494, 8.507059e+37
  %v1496 = vand.u32 %v1484, 2147483648
  %v1497 = vor.u32 1.1754944e-38, %v1496
  %v1498 = vsel %vm1495, %v1497, %v1493
  %v1499 = vmul.f32 1.0, %v1498
  %v1500 = vmul.f32 %v1479, %v1499
  %v1501 = vld [vmem:[%s7] sm:$0xf]
  %v1502 = vld [vmem:[%s8] sm:$0x1]
  %vm1503 = vcmask 31744
  %v1505 = vsel %vm1503, %v1500, 0
  %vm1507 = vcmask 1043456
  %v1509 = vsel %vm1507, %v1501, 0
  %1511 = vmatpush.msra.mxu0 0.0
  %1512 = vmatpush.msra.mxu0 0.0
  %1513 = vmatpush.msra.mxu0 0.0
  %1514 = vmatpush.msra.mxu0 0.0
  %1515 = vmatpush.msra.mxu0 0.0
  %1516 = vmatpush.msra.mxu0 0.0
  %1517 = vmatpush.msra.mxu0 0.0
  %1518 = vmatpush.msra.mxu0 0.0
  %1519 = vmatpush.msra.mxu0 0.0
  %1520 = vmatpush.msra.mxu0 0.0
  %1521 = vmatpush.msra.mxu0 0.0
  %1522 = vmatpush.msra.mxu0 0.0
  %1523 = vmatpush.msra.mxu0 0.0
  %1524 = vmatpush.msra.mxu0 0.0
  %1525 = vmatpush.msra.mxu0 0.0
  %1526 = vmatpush.msra.mxu0 %v1509
  %1527 = vmatmul.f32.gmra.mxu0 %v1505
  %v1528 = vpop.f32.mrf.mxu0
  %v1529 = vadd.f32 %v1502, %v1528
  %1530 = vdwg.mxu0
  %v1531 = vxor.u32 %v1529, 2147483648
  %v1532 = vmul.f32 %v1531, 1.442695
  %v1533 = vpow.pop %v1532
  %v1534 = vadd.f32 %v1533, 1.0
  %v1535 = vrcp.pop %v1534
  %v1536 = vmul.f32 %v1534, %v1535
  %v1537 = vsub.f32 1.0, %v1536
  %v1538 = vmul.f32 %v1535, %v1537
  %v1539 = vadd.f32 %v1535, %v1538
  %vm1540 = vweird.f32 %v1534
  %vm1541 = vweird.f32 %v1535
  %vm1542 = vmor %vm1540, %vm1541
  %v1543 = vsel %vm1542, %v1535, %v1539
  %v1544 = vand.u32 2147483647, %v1534
  %vm1545 = vcmp.eq.f32.partialorder %v1544, 8.507059e+37
  %v1546 = vand.u32 %v1534, 2147483648
  %v1547 = vor.u32 1.1754944e-38, %v1546
  %v1548 = vsel %vm1545, %v1547, %v1543
  %v1549 = vmul.f32 1.0, %v1548
  loop: start=0, step=1, limit=2
  $region60: #{mbconv_forward.1} parent=0 // loop_pre_header
    _
  $region61: #{mbconv_forward.1} parent=0 // loop_header
    %s1551 = sphi 0, %s1555
    %p1552 = scmp.ge.s32.totalorder %s1551, 2
  $region62: #{mbconv_forward.1} parent=0 // loop_header_branch
    %1554 = sbr.rel (%p1552) target = $region66
  $region63: #{mbconv_forward.1} parent=0 // loop_body
    %s1556 = smul.u32 %s1551, 8
    %s1557 = smul.u32 %s1551, 128
    %s1558 = smul.u32 %s1556, 16
    %s1559 = scalar_lea.vmem [#allocation3], %s1558
    %v1560 = vld [vmem:[%s1559] sm:$0xff]
    %v1561 = vld [vmem:[%s1559 + $0x8] sm:$0xff]
    %v1562 = vld [vmem:[%s1559 + $0x10] sm:$0xff]
    %v1563 = vld [vmem:[%s1559 + $0x18] sm:$0xff]
    %v1564 = vld [vmem:[%s1559 + $0x20] sm:$0xff]
    %v1565 = vld [vmem:[%s1559 + $0x28] sm:$0xff]
    %v1566 = vld [vmem:[%s1559 + $0x30] sm:$0xff]
    %v1567 = vld [vmem:[%s1559 + $0x38] sm:$0xff]
    %v1568 = vld [vmem:[%s1559 + $0x40] sm:$0xff]
    %v1569 = vld [vmem:[%s1559 + $0x48] sm:$0xff]
    %v1570 = vld [vmem:[%s1559 + $0x50] sm:$0xff]
    %v1571 = vld [vmem:[%s1559 + $0x58] sm:$0xff]
    %v1572 = vld [vmem:[%s1559 + $0x60] sm:$0xff]
    %v1573 = vld [vmem:[%s1559 + $0x68] sm:$0xff]
    %v1574 = vld [vmem:[%s1559 + $0x70] sm:$0xff]
    %v1575 = vld [vmem:[%s1559 + $0x78] sm:$0xff]
    %v1576 = vperm.slane %v1549, 0
    %v1577 = vmul.f32 %v1560, %v1576
    %v1578 = vmul.f32 %v1561, %v1576
    %v1579 = vmul.f32 %v1562, %v1576
    %v1580 = vmul.f32 %v1563, %v1576
    %v1581 = vmul.f32 %v1564, %v1576
    %v1582 = vmul.f32 %v1565, %v1576
    %v1583 = vmul.f32 %v1566, %v1576
    %v1584 = vmul.f32 %v1567, %v1576
    %v1585 = vmul.f32 %v1568, %v1576
    %v1586 = vmul.f32 %v1569, %v1576
    %v1587 = vmul.f32 %v1570, %v1576
    %v1588 = vmul.f32 %v1571, %v1576
    %v1589 = vmul.f32 %v1572, %v1576
    %v1590 = vmul.f32 %v1573, %v1576
    %v1591 = vmul.f32 %v1574, %v1576
    %v1592 = vmul.f32 %v1575, %v1576
    %v1593 = vld [vmem:[%s9] sm:$0xff]
    %v1594 = vld [vmem:[%s9 + $0x8] sm:$0xff]
    %v1595 = vld [vmem:[%s10] sm:$0xff]
    %v1596 = vld [vmem:[%s10 + $0x8] sm:$0xff]
    %1598 = vset.pattern.permute.xlu0 0
    %1599 = vperm.xlu0 %1598, %v1595
    %v1600 = vpop.permute.xlu0 %1599
    %1603 = vset.pattern.permute.xlu0 0
    %1604 = vperm.xlu0 %1603, %v1596
    %v1605 = vpop.permute.xlu0 %1604
    %v1608 = vsel %vm38, %v1593, 0
    %v1611 = vsel %vm38, %v1594, 0
    %v1614 = vsel %vm38, %v1577, 0
    %v1617 = vsel %vm38, %v1578, 0
    %v1620 = vsel %vm38, %v1579, 0
    %v1623 = vsel %vm38, %v1580, 0
    %v1626 = vsel %vm38, %v1581, 0
    %v1629 = vsel %vm38, %v1582, 0
    %v1632 = vsel %vm38, %v1583, 0
    %v1635 = vsel %vm38, %v1584, 0
    %v1638 = vsel %vm38, %v1585, 0
    %v1641 = vsel %vm38, %v1586, 0
    %v1644 = vsel %vm38, %v1587, 0
    %v1647 = vsel %vm38, %v1588, 0
    %v1650 = vsel %vm38, %v1589, 0
    %v1653 = vsel %vm38, %v1590, 0
    %v1656 = vsel %vm38, %v1591, 0
    %v1659 = vsel %vm38, %v1592, 0
    %1661 = vmatpush.xpose.msra.mxu0 %v1659
    %1662 = vmatpush.xpose.msra.mxu0 %v1656
    %1663 = vmatpush.xpose.msra.mxu0 %v1653
    %1664 = vmatpush.xpose.msra.mxu0 %v1650
    %1665 = vmatpush.xpose.msra.mxu0 %v1647
    %1666 = vmatpush.xpose.msra.mxu0 %v1644
    %1667 = vmatpush.xpose.msra.mxu0 %v1641
    %1668 = vmatpush.xpose.msra.mxu0 %v1638
    %1669 = vmatpush.xpose.msra.mxu0 %v1635
    %1670 = vmatpush.xpose.msra.mxu0 %v1632
    %1671 = vmatpush.xpose.msra.mxu0 %v1629
    %1672 = vmatpush.xpose.msra.mxu0 %v1626
    %1673 = vmatpush.xpose.msra.mxu0 %v1623
    %1674 = vmatpush.xpose.msra.mxu0 %v1620
    %1675 = vmatpush.xpose.msra.mxu0 %v1617
    %1676 = vmatpush.xpose.msra.mxu0 %v1614
    %1677 = vmatmul.f32.gmra.mxu0 %v1608
    %v1678 = vpop.f32.mrf.mxu0
    %v1679 = vadd.f32 %v1600, %v1678
    %1680 = vmatmul.f32.gmra.mxu0 %v1611
    %v1681 = vpop.f32.mrf.mxu0
    %v1682 = vadd.f32 %v1605, %v1681
    %1683 = vdwg.mxu0
    %s1684 = sshra.s32 %s1557, 7
    %s1685 = sand.u32 %s1557, 127
    %s1686 = smul.addr %s1684, 8
    %s1687 = scalar_lea.vmem %s0, %s1686
    %v1688 = vld [vmem:[%s1687] sm:$0xff]
    %v1689 = vld [vmem:[%s1687 + $0x10] sm:$0xff]
    %v1690 = vadd.f32 %v1679, %v1688
    %v1691 = vadd.f32 %v1682, %v1689
    %s1692 = smul.addr %s1684, 8
    %s1693 = scalar_lea.vmem %s11, %s1692
    %1694 = vst [vmem:[%s1693] sm:$0xff] %v1690
    %1695 = vst [vmem:[%s1693 + $0x10] sm:$0xff] %v1691
  $region64: #{mbconv_forward.1} parent=0 // loop_footer
    %s1555 = sadd.s32 1, %s1551
  $region65: #{mbconv_forward.1} parent=0 // loop_footer_branch
    %1550 = sbr.rel target = $region61
  $region66: #{mbconv_forward.1} parent=0 // loop_exit
    _
  // Predicated region
  $region67: #{mbconv_forward.1} parent=0 // pred_check
    _
  $region68: #{mbconv_forward.1} parent=0 // pred_check_branch
    %1697 = sbr.rel (0) target = $region70
  $region69: #{mbconv_forward.1} parent=0 // pred_region
    _
  $region70: #{mbconv_forward.1} parent=0 // pred_fallthru
    _
  // Predicated region
  $region71: #{mbconv_forward.1} parent=0 // pred_check
    _
  $region72: #{mbconv_forward.1} parent=0 // pred_check_branch
    %1699 = sbr.rel (0) target = $region74
  $region73: #{mbconv_forward.1} parent=0 // pred_region
    _
  $region74: #{mbconv_forward.1} parent=0 // pred_fallthru
    _

</llo_original>
